<compile_context>
chip_gen: v6e
topology: v6e:2x2x1
jax: 0.10.0
libtpu: 0.0.40
codegen_flags: <defaults>
</compile_context>

<pallas_src>
import functools

import jax
import jax.numpy as jnp
from jax import lax
from jax.experimental import pallas as pl
from jax.experimental.pallas import tpu as pltpu

EPS = 1e-6


def _layer_norm(x, gamma, beta):
    # x: (TM, D); gamma/beta: (1, D) -- matches torch.nn.LayerNorm(D, eps=1e-6)
    mean = jnp.mean(x, axis=-1, keepdims=True)
    var = jnp.mean((x - mean) ** 2, axis=-1, keepdims=True)
    return (x - mean) * lax.rsqrt(var + EPS) * gamma + beta


# ---------------------------------------------------------------------------
# Fused kernel: per-batch image K / (V@Wo) into scratch at t == 0, then
# attention + FFN for a tile of TM vertices (query = vertex token).
# ---------------------------------------------------------------------------
def _img_attn_kernel(vert_ref, img_ref,
                     wkT_ref, bkT_ref, wvo_img_ref, bvo_img_ref,
                     w_vert_ref,
                     ln1_g_ref, ln1_b_ref,
                     w1_ref, b1_ref, w2_ref, b2_ref,
                     ln2_g_ref, ln2_b_ref,
                     out_ref,
                     kT_ref, vo_ref,
                     *, n_heads, d_k, d_model):
    H, dk, D = n_heads, d_k, d_model
    HDk = H * dk

    # ---- shared image-token K^T and Wo-folded V, computed once per batch ----
    @pl.when(pl.program_id(1) == 0)
    def _():
        x_img = img_ref[0]                                         # (L, Dimg)
        # K^T = (x_img @ wk_img)^T + bk^T ; built via a minor-dim contraction
        # so the per-head score matmuls need no transpose and slice K on the
        # sublane (leading) axis only.
        kT_ref[...] = lax.dot_general(
            wkT_ref[...], x_img, (((1,), (1,)), ((), ())),
            preferred_element_type=jnp.float32) + bkT_ref[...]     # (HDk, L)
        # Wo-folded image V for all heads in one wide matmul: (L, H*D)
        vo_wide = (jnp.dot(x_img, wvo_img_ref[...],
                           preferred_element_type=jnp.float32)
                   + bvo_img_ref[...])
        for h in range(H):                                          # static
            vo_ref[h] = vo_wide[:, h * D:(h + 1) * D]               # (L, D)

    # ---- per-tile vertex math ----
    vert = vert_ref[0]                                              # (TM, D)
    # One wide projection: [ q*scale | k_self | v_self@Wo ] -> (TM, 2*HDk+H*D)
    proj = jnp.dot(vert, w_vert_ref[...], preferred_element_type=jnp.float32)

    acc = jnp.zeros_like(vert)                                      # (TM, D)
    for h in range(H):                                              # static, H small
        qh = proj[:, h * dk:(h + 1) * dk]                           # (TM, dk)
        kh_self = proj[:, HDk + h * dk:HDk + (h + 1) * dk]          # (TM, dk)
        vo_self_h = proj[:, 2 * HDk + h * D:2 * HDk + (h + 1) * D]  # (TM, D)

        # scores against image keys: (TM, dk) x (dk, L) -> (TM, L)  (MXU)
        s_img = jnp.dot(qh, kT_ref[h * dk:(h + 1) * dk, :],
                        preferred_element_type=jnp.float32)
        # score against the vertex's own key: (TM, 1)
        s_self = jnp.sum(qh * kh_self, axis=-1, keepdims=True)

        # joint softmax over S = 1 + L tokens
        m = jnp.maximum(jnp.max(s_img, axis=-1, keepdims=True), s_self)
        e_img = jnp.exp(s_img - m)                                  # (TM, L)
        e_self = jnp.exp(s_self - m)                                # (TM, 1)
        inv = pl.reciprocal(e_self + jnp.sum(e_img, axis=-1, keepdims=True))

        # Wo already folded into vo_ref / vo_self_h -> contribution is (TM, D)
        acc = acc + (jnp.dot(e_img, vo_ref[h],
                             preferred_element_type=jnp.float32)
                     + e_self * vo_self_h) * inv

    # Residual + LayerNorm (post-norm), then position-wise FFN + LN.
    y = _layer_norm(acc + vert, ln1_g_ref[...], ln1_b_ref[...])
    h1 = jnp.maximum(
        jnp.dot(y, w1_ref[...], preferred_element_type=jnp.float32) + b1_ref[...],
        0.0)
    z = jnp.dot(h1, w2_ref[...], preferred_element_type=jnp.float32) + b2_ref[...]
    out_ref[0] = _layer_norm(z + y, ln2_g_ref[...], ln2_b_ref[...])


# ---------------------------------------------------------------------------
# Wrapper
# ---------------------------------------------------------------------------
def img_attn_forward(verts_f, img_f, params, *, n_heads, tm=128):
    B, V, Dv = verts_f.shape
    _, L, Dimg = img_f.shape
    H = n_heads
    d_k = Dv // H
    d_v = Dv // H
    HDk = H * d_k
    f32 = jnp.float32
    scale = 1.0 / (float(d_k) ** 0.5)

    wq = params["wq"].astype(f32)
    wk = params["wk"].astype(f32)
    wv = params["wv"].astype(f32)
    wo = params["wo"].astype(f32)
    fc_w = params["fc_w"].astype(f32)
    fc_b = params["fc_b"].astype(f32)

    # --- host-side weight folding ---
    # fc folded into the image K/V weights.
    wk_img = fc_w @ wk                      # (Dimg, HDk)
    bk_img = fc_b @ wk                      # (1, HDk)
    wv_img = fc_w @ wv                      # (Dimg, HDv)
    bv_img = fc_b @ wv                      # (1, HDv)
    # K is stored transposed -> pass (HDk, Dimg) weight and (HDk, 1) bias.
    wkT_img = jnp.asarray(wk_img.T, f32)
    bkT_img = jnp.asarray(bk_img.T, f32)

    # Wo folded (per head) into the image V and the vertex self-V.
    def fold_wo(w):                          # (X, H*d_v) -> (X, H*Dv)
        return jnp.concatenate(
            [w[:, h * d_v:(h + 1) * d_v] @ wo[h * d_v:(h + 1) * d_v, :]
             for h in range(H)], axis=1)

    wvo_img = fold_wo(wv_img).astype(f32)    # (Dimg, H*Dv)
    bvo_img = fold_wo(bv_img).astype(f32)    # (1, H*Dv)
    wvo_self = fold_wo(wv)                   # (Dv, H*Dv)

    # Single wide vertex projection weight: [wq*scale | wk | wvo_self].
    w_vert = jnp.concatenate([wq * scale, wk, wvo_self], axis=1).astype(f32)

    # Vertex tile size: multiple of 8 sublanes, capped at `tm` (128 default).
    TM = min(tm, ((V + 7) // 8) * 8)
    TM = max(8, (TM // 8) * 8)
    n_vt = -(-V // TM)
    V_pad = n_vt * TM
    verts_pad = verts_f.astype(f32)
    if V_pad != V:
        # Padded rows are zeros; they only see LayerNorm's rsqrt(eps) path and
        # are sliced off afterwards (finite in f32).
        verts_pad = jnp.pad(verts_pad, ((0, 0), (0, V_pad - V), (0, 0)))

    weights = [
        wkT_img, bkT_img, wvo_img, bvo_img, w_vert,
        params["ln1_g"].astype(f32), params["ln1_b"].astype(f32),
        params["w1"].astype(f32), params["b1"].astype(f32),
        params["w2"].astype(f32), params["b2"].astype(f32),
        params["ln2_g"].astype(f32), params["ln2_b"].astype(f32),
    ]
    # Constant index_map => each weight is DMA'd once and stays resident.
    weight_specs = [pl.BlockSpec(w.shape, lambda b, t: (0, 0)) for w in weights]

    kernel = functools.partial(_img_attn_kernel,
                               n_heads=H, d_k=d_k, d_model=Dv)

    out_pad = pl.pallas_call(
        kernel,
        out_shape=jax.ShapeDtypeStruct((B, V_pad, Dv), f32),
        grid=(B, n_vt),
        in_specs=[
            pl.BlockSpec((1, TM, Dv), lambda b, t: (b, t, 0)),   # vertex tile
            pl.BlockSpec((1, L, Dimg), lambda b, t: (b, 0, 0)),  # image tokens
        ] + weight_specs,
        out_specs=pl.BlockSpec((1, TM, Dv), lambda b, t: (b, t, 0)),
        scratch_shapes=[
            pltpu.VMEM((HDk, L), f32),        # K_img^T, built once per batch
            pltpu.VMEM((H, L, Dv), f32),      # Wo-folded image V, per head
        ],
        compiler_params=pltpu.CompilerParams(
            # t must be "arbitrary": the K/V scratch written at t==0 carries
            # across the vertex tiles of one batch. b stays "parallel" so the
            # two TensorCores on v7x shard over batches.
            dimension_semantics=("parallel", "arbitrary")),
    )(verts_pad, img_f.astype(f32), *weights)

    return out_pad[:, :V, :]


# ---------------------------------------------------------------------------
# Pure-JAX reference (full-sequence attention on the concatenated tokens,
# then slice token 0) -- mirrors the PyTorch module exactly.
# ---------------------------------------------------------------------------
def reference_forward(verts_f, img_f, params, *, n_heads):
    B, V, Dv = verts_f.shape
    _, L, _ = img_f.shape
    d_k = Dv // n_heads
    S = 1 + L

    img_p = img_f @ params["fc_w"] + params["fc_b"][0]
    x_vert = verts_f.reshape(B * V, 1, Dv)
    x_img = jnp.repeat(img_p[:, None], V, axis=1).reshape(B * V, L, Dv)
    x = jnp.concatenate([x_vert, x_img], axis=1)              # (BV, S, Dv)

    residual = x
    q = (x @ params["wq"]).reshape(B * V, S, n_heads, d_k).transpose(0, 2, 1, 3)
    k = (x @ params["wk"]).reshape(B * V, S, n_heads, d_k).transpose(0, 2, 1, 3)
    v = (x @ params["wv"]).reshape(B * V, S, n_heads, d_k).transpose(0, 2, 1, 3)
    attn = jax.nn.softmax((q / (d_k ** 0.5)) @ k.transpose(0, 1, 3, 2), axis=-1)
    o = (attn @ v).transpose(0, 2, 1, 3).reshape(B * V, S, -1)
    y = o @ params["wo"] + residual

    def ln(t, g, b):
        m = jnp.mean(t, axis=-1, keepdims=True)
        var = jnp.mean((t - m) ** 2, axis=-1, keepdims=True)
        return (t - m) / jnp.sqrt(var + EPS) * g + b

    y = ln(y, params["ln1_g"][0], params["ln1_b"][0])
    h = jax.nn.relu(y @ params["w1"] + params["b1"][0])
    z = h @ params["w2"] + params["b2"][0]
    z = ln(z + y, params["ln2_g"][0], params["ln2_b"][0])
    return z[:, :1].reshape(B, V, Dv)


if __name__ == "__main__":
    # Small shapes consistent with the module.
    B, V, L = 2, 8, 16
    verts_f_dim, img_f_dim = 32, 64
    n_heads = 4
    d_k = d_v = verts_f_dim // n_heads
    hid_dim = verts_f_dim

    key = jax.random.PRNGKey(0)
    ks = jax.random.split(key, 16)
    f32 = jnp.float32

    params = {
        "fc_w": 0.05 * jax.random.normal(ks[0], (img_f_dim, verts_f_dim), f32),
        "fc_b": 0.05 * jax.random.normal(ks[1], (1, verts_f_dim), f32),
        "wq": 0.05 * jax.random.normal(ks[2], (verts_f_dim, n_heads * d_k), f32),
        "wk": 0.05 * jax.random.normal(ks[3], (verts_f_dim, n_heads * d_k), f32),
        "wv": 0.05 * jax.random.normal(ks[4], (verts_f_dim, n_heads * d_v), f32),
        "wo": 0.05 * jax.random.normal(ks[5], (n_heads * d_v, verts_f_dim), f32),
        "ln1_g": 1.0 + 0.1 * jax.random.normal(ks[6], (1, verts_f_dim), f32),
        "ln1_b": 0.1 * jax.random.normal(ks[7], (1, verts_f_dim), f32),
        "w1": 0.05 * jax.random.normal(ks[8], (verts_f_dim, hid_dim), f32),
        "b1": 0.05 * jax.random.normal(ks[9], (1, hid_dim), f32),
        "w2": 0.05 * jax.random.normal(ks[10], (hid_dim, verts_f_dim), f32),
        "b2": 0.05 * jax.random.normal(ks[11], (1, verts_f_dim), f32),
        "ln2_g": 1.0 + 0.1 * jax.random.normal(ks[12], (1, verts_f_dim), f32),
        "ln2_b": 0.1 * jax.random.normal(ks[13], (1, verts_f_dim), f32),
    }

    verts_f = jax.random.normal(ks[14], (B, V, verts_f_dim), f32)
    img_f = jax.random.normal(ks[15], (B, L, img_f_dim), f32)

    out = img_attn_forward(verts_f, img_f, params, n_heads=n_heads)
    out = jax.block_until_ready(out)

    ref = reference_forward(verts_f, img_f, params, n_heads=n_heads)
    assert out.shape == (B, V, verts_f_dim)
    assert jnp.allclose(out, ref, atol=1e-4, rtol=1e-4), (
        float(jnp.max(jnp.abs(out - ref))))

    print("KERNEL_OK")
</pallas_src>

<mosaic_0001>
module attributes {stable_mosaic.version = 11 : i64} {
  func.func @_img_attn_kernel(%arg0: i32, %arg1: i32, %arg2: memref<1x8x32xf32, #tpu.memory_space<vmem>>, %arg3: memref<1x16x64xf32, #tpu.memory_space<vmem>>, %arg4: memref<32x64xf32, #tpu.memory_space<vmem>>, %arg5: memref<32x1xf32, #tpu.memory_space<vmem>>, %arg6: memref<64x128xf32, #tpu.memory_space<vmem>>, %arg7: memref<1x128xf32, #tpu.memory_space<vmem>>, %arg8: memref<32x192xf32, #tpu.memory_space<vmem>>, %arg9: memref<1x32xf32, #tpu.memory_space<vmem>>, %arg10: memref<1x32xf32, #tpu.memory_space<vmem>>, %arg11: memref<32x32xf32, #tpu.memory_space<vmem>>, %arg12: memref<1x32xf32, #tpu.memory_space<vmem>>, %arg13: memref<32x32xf32, #tpu.memory_space<vmem>>, %arg14: memref<1x32xf32, #tpu.memory_space<vmem>>, %arg15: memref<1x32xf32, #tpu.memory_space<vmem>>, %arg16: memref<1x32xf32, #tpu.memory_space<vmem>>, %arg17: memref<1x8x32xf32, #tpu.memory_space<vmem>>, %arg18: memref<32x16xf32, #tpu.memory_space<vmem>>, %arg19: memref<4x16x32xf32, #tpu.memory_space<vmem>>) attributes {dimension_semantics = [#tpu.dimension_semantics<parallel>, #tpu.dimension_semantics<arbitrary>], iteration_bounds = array<i64: 2, 1>, scalar_prefetch = 0 : i64, scratch_operands = 2 : i64, tpu.core_type = #tpu.core_type<tc>, window_params = [{transform_indices = @transform_0, window_bounds = array<i64: 1, 8, 32>}, {transform_indices = @transform_1, window_bounds = array<i64: 1, 16, 64>}, {pipeline_mode = #tpu.pipeline_mode<synchronous>, transform_indices = @transform_2, window_bounds = array<i64: 32, 64>}, {pipeline_mode = #tpu.pipeline_mode<synchronous>, transform_indices = @transform_3, window_bounds = array<i64: 32, 1>}, {pipeline_mode = #tpu.pipeline_mode<synchronous>, transform_indices = @transform_4, window_bounds = array<i64: 64, 128>}, {pipeline_mode = #tpu.pipeline_mode<synchronous>, transform_indices = @transform_5, window_bounds = array<i64: 1, 128>}, {pipeline_mode = #tpu.pipeline_mode<synchronous>, transform_indices = @transform_6, window_bounds = array<i64: 32, 192>}, {pipeline_mode = #tpu.pipeline_mode<synchronous>, transform_indices = @transform_7, window_bounds = array<i64: 1, 32>}, {pipeline_mode = #tpu.pipeline_mode<synchronous>, transform_indices = @transform_8, window_bounds = array<i64: 1, 32>}, {pipeline_mode = #tpu.pipeline_mode<synchronous>, transform_indices = @transform_9, window_bounds = array<i64: 32, 32>}, {pipeline_mode = #tpu.pipeline_mode<synchronous>, transform_indices = @transform_10, window_bounds = array<i64: 1, 32>}, {pipeline_mode = #tpu.pipeline_mode<synchronous>, transform_indices = @transform_11, window_bounds = array<i64: 32, 32>}, {pipeline_mode = #tpu.pipeline_mode<synchronous>, transform_indices = @transform_12, window_bounds = array<i64: 1, 32>}, {pipeline_mode = #tpu.pipeline_mode<synchronous>, transform_indices = @transform_13, window_bounds = array<i64: 1, 32>}, {pipeline_mode = #tpu.pipeline_mode<synchronous>, transform_indices = @transform_14, window_bounds = array<i64: 1, 32>}, {transform_indices = @transform_15, window_bounds = array<i64: 1, 8, 32>}]} {
    %c0_i32 = arith.constant 0 : i32
    %0 = arith.cmpi eq, %arg1, %c0_i32 : i32
    %1 = arith.extui %0 : i1 to i32
    %c0_i32_0 = arith.constant 0 : i32
    %2 = arith.cmpi ne, %1, %c0_i32_0 : i32
    scf.if %2 {
      %c0_72 = arith.constant 0 : index
      %c0_73 = arith.constant 0 : index
      %c0_74 = arith.constant 0 : index
      %189 = vector.load %arg3[%c0_72, %c0_73, %c0_74] : memref<1x16x64xf32, #tpu.memory_space<vmem>>, vector<1x16x64xf32>
      %190 = vector.shape_cast %189 : vector<1x16x64xf32> to vector<16x64xf32>
      %c0_75 = arith.constant 0 : index
      %c0_76 = arith.constant 0 : index
      %191 = vector.load %arg4[%c0_75, %c0_76] : memref<32x64xf32, #tpu.memory_space<vmem>>, vector<32x64xf32>
      %cst_77 = arith.constant dense<0.000000e+00> : vector<32x16xf32>
      %192 = tpu.matmul %191, %190, %cst_77 {dimension_numbers = #tpu.dot_dimension_numbers<[1], [1], [0], [0], [0, 0, 1, 0], [], []>} : vector<32x64xf32>, vector<16x64xf32>, vector<32x16xf32> -> vector<32x16xf32>
      %c0_78 = arith.constant 0 : index
      %c0_79 = arith.constant 0 : index
      %193 = vector.load %arg5[%c0_78, %c0_79] : memref<32x1xf32, #tpu.memory_space<vmem>>, vector<32x1xf32>
      %194 = vector.broadcast %193 : vector<32x1xf32> to vector<32x16xf32>
      %195 = arith.addf %192, %194 : vector<32x16xf32>
      %c0_80 = arith.constant 0 : index
      %c0_81 = arith.constant 0 : index
      %196 = vector.load %arg18[%c0_80, %c0_81] : memref<32x16xf32, #tpu.memory_space<vmem>>, vector<32x16xf32>
      tpu.vector_store %arg18[%c0_80, %c0_81], %195 {strides = array<i32>} : memref<32x16xf32, #tpu.memory_space<vmem>>, vector<32x16xf32>,
      %c0_82 = arith.constant 0 : index
      %c0_83 = arith.constant 0 : index
      %197 = vector.load %arg6[%c0_82, %c0_83] : memref<64x128xf32, #tpu.memory_space<vmem>>, vector<64x128xf32>
      %cst_84 = arith.constant dense<0.000000e+00> : vector<16x128xf32>
      %198 = tpu.matmul %190, %197, %cst_84 {dimension_numbers = #tpu.dot_dimension_numbers<[1], [0], [0], [1], [0, 0, 1, 1], [], []>} : vector<16x64xf32>, vector<64x128xf32>, vector<16x128xf32> -> vector<16x128xf32>
      %c0_85 = arith.constant 0 : index
      %c0_86 = arith.constant 0 : index
      %199 = vector.load %arg7[%c0_85, %c0_86] : memref<1x128xf32, #tpu.memory_space<vmem>>, vector<1x128xf32>
      %200 = vector.broadcast %199 : vector<1x128xf32> to vector<16x128xf32>
      %201 = arith.addf %198, %200 : vector<16x128xf32>
      %202 = vector.extract_strided_slice %201 {offsets = [0, 0], sizes = [16, 32], strides = [1, 1]} : vector<16x128xf32> to vector<16x32xf32>
      %c0_87 = arith.constant 0 : index
      %c0_88 = arith.constant 0 : index
      %c0_89 = arith.constant 0 : index
      %203 = vector.load %arg19[%c0_87, %c0_88, %c0_89] : memref<4x16x32xf32, #tpu.memory_space<vmem>>, vector<1x16x32xf32>
      %204 = vector.shape_cast %203 : vector<1x16x32xf32> to vector<16x32xf32>
      %205 = vector.shape_cast %202 : vector<16x32xf32> to vector<1x16x32xf32>
      tpu.vector_store %arg19[%c0_87, %c0_88, %c0_89], %205 {strides = array<i32>} : memref<4x16x32xf32, #tpu.memory_space<vmem>>, vector<1x16x32xf32>,
      %206 = vector.extract_strided_slice %201 {offsets = [0, 32], sizes = [16, 32], strides = [1, 1]} : vector<16x128xf32> to vector<16x32xf32>
      %c1_90 = arith.constant 1 : index
      %c0_91 = arith.constant 0 : index
      %c0_92 = arith.constant 0 : index
      %207 = vector.load %arg19[%c1_90, %c0_91, %c0_92] : memref<4x16x32xf32, #tpu.memory_space<vmem>>, vector<1x16x32xf32>
      %208 = vector.shape_cast %207 : vector<1x16x32xf32> to vector<16x32xf32>
      %209 = vector.shape_cast %206 : vector<16x32xf32> to vector<1x16x32xf32>
      tpu.vector_store %arg19[%c1_90, %c0_91, %c0_92], %209 {strides = array<i32>} : memref<4x16x32xf32, #tpu.memory_space<vmem>>, vector<1x16x32xf32>,
      %210 = vector.extract_strided_slice %201 {offsets = [0, 64], sizes = [16, 32], strides = [1, 1]} : vector<16x128xf32> to vector<16x32xf32>
      %c2_93 = arith.constant 2 : index
      %c0_94 = arith.constant 0 : index
      %c0_95 = arith.constant 0 : index
      %211 = vector.load %arg19[%c2_93, %c0_94, %c0_95] : memref<4x16x32xf32, #tpu.memory_space<vmem>>, vector<1x16x32xf32>
      %212 = vector.shape_cast %211 : vector<1x16x32xf32> to vector<16x32xf32>
      %213 = vector.shape_cast %210 : vector<16x32xf32> to vector<1x16x32xf32>
      tpu.vector_store %arg19[%c2_93, %c0_94, %c0_95], %213 {strides = array<i32>} : memref<4x16x32xf32, #tpu.memory_space<vmem>>, vector<1x16x32xf32>,
      %214 = vector.extract_strided_slice %201 {offsets = [0, 96], sizes = [16, 32], strides = [1, 1]} : vector<16x128xf32> to vector<16x32xf32>
      %c3_96 = arith.constant 3 : index
      %c0_97 = arith.constant 0 : index
      %c0_98 = arith.constant 0 : index
      %215 = vector.load %arg19[%c3_96, %c0_97, %c0_98] : memref<4x16x32xf32, #tpu.memory_space<vmem>>, vector<1x16x32xf32>
      %216 = vector.shape_cast %215 : vector<1x16x32xf32> to vector<16x32xf32>
      %217 = vector.shape_cast %214 : vector<16x32xf32> to vector<1x16x32xf32>
      tpu.vector_store %arg19[%c3_96, %c0_97, %c0_98], %217 {strides = array<i32>} : memref<4x16x32xf32, #tpu.memory_space<vmem>>, vector<1x16x32xf32>,
    } else {
    }
    %c0 = arith.constant 0 : index
    %c0_1 = arith.constant 0 : index
    %c0_2 = arith.constant 0 : index
    %3 = vector.load %arg2[%c0, %c0_1, %c0_2] : memref<1x8x32xf32, #tpu.memory_space<vmem>>, vector<1x8x32xf32>
    %4 = vector.shape_cast %3 : vector<1x8x32xf32> to vector<8x32xf32>
    %c0_3 = arith.constant 0 : index
    %c0_4 = arith.constant 0 : index
    %5 = vector.load %arg8[%c0_3, %c0_4] : memref<32x192xf32, #tpu.memory_space<vmem>>, vector<32x192xf32>
    %cst = arith.constant dense<0.000000e+00> : vector<8x192xf32>
    %6 = tpu.matmul %4, %5, %cst {dimension_numbers = #tpu.dot_dimension_numbers<[1], [0], [0], [1], [0, 0, 1, 1], [], []>} : vector<8x32xf32>, vector<32x192xf32>, vector<8x192xf32> -> vector<8x192xf32>
    %cst_5 = arith.constant 0.000000e+00 : f32
    %7 = vector.broadcast %cst_5 : f32 to vector<8x32xf32>
    %8 = vector.extract_strided_slice %6 {offsets = [0, 0], sizes = [8, 8], strides = [1, 1]} : vector<8x192xf32> to vector<8x8xf32>
    %9 = vector.extract_strided_slice %6 {offsets = [0, 32], sizes = [8, 8], strides = [1, 1]} : vector<8x192xf32> to vector<8x8xf32>
    %10 = vector.extract_strided_slice %6 {offsets = [0, 64], sizes = [8, 32], strides = [1, 1]} : vector<8x192xf32> to vector<8x32xf32>
    %c0_6 = arith.constant 0 : index
    %c0_7 = arith.constant 0 : index
    %11 = vector.load %arg18[%c0_6, %c0_7] : memref<32x16xf32, #tpu.memory_space<vmem>>, vector<8x16xf32>
    %cst_8 = arith.constant dense<0.000000e+00> : vector<8x16xf32>
    %12 = tpu.matmul %8, %11, %cst_8 {dimension_numbers = #tpu.dot_dimension_numbers<[1], [0], [0], [1], [0, 0, 1, 1], [], []>} : vector<8x8xf32>, vector<8x16xf32>, vector<8x16xf32> -> vector<8x16xf32>
    %13 = arith.mulf %8, %9 : vector<8x8xf32>
    %cst_9 = arith.constant dense<0.000000e+00> : vector<8xf32>
    %14 = vector.multi_reduction <add>, %13, %cst_9 [1] : vector<8x8xf32> to vector<8xf32>
    %15 = vector.shape_cast %14 : vector<8xf32> to vector<8x1xf32>
    %cst_10 = arith.constant dense<0xFF800000> : vector<8xf32>
    %16 = vector.multi_reduction <maximumf>, %12, %cst_10 [1] : vector<8x16xf32> to vector<8xf32>
    %17 = vector.shape_cast %16 : vector<8xf32> to vector<8x1xf32>
    %18 = arith.maximumf %17, %15 : vector<8x1xf32>
    %19 = vector.broadcast %18 : vector<8x1xf32> to vector<8x16xf32>
    %20 = arith.subf %12, %19 : vector<8x16xf32>
    %21 = math.exp %20 : vector<8x16xf32>
    %22 = arith.subf %15, %18 : vector<8x1xf32>
    %23 = math.exp %22 : vector<8x1xf32>
    %cst_11 = arith.constant dense<0.000000e+00> : vector<8xf32>
    %24 = vector.multi_reduction <add>, %21, %cst_11 [1] : vector<8x16xf32> to vector<8xf32>
    %25 = vector.shape_cast %24 : vector<8xf32> to vector<8x1xf32>
    %26 = arith.addf %23, %25 : vector<8x1xf32>
    %27 = tpu.reciprocal %26 : vector<8x1xf32> -> vector<8x1xf32>
    %c0_12 = arith.constant 0 : index
    %c0_13 = arith.constant 0 : index
    %c0_14 = arith.constant 0 : index
    %28 = vector.load %arg19[%c0_12, %c0_13, %c0_14] : memref<4x16x32xf32, #tpu.memory_space<vmem>>, vector<1x16x32xf32>
    %29 = vector.shape_cast %28 : vector<1x16x32xf32> to vector<16x32xf32>
    %cst_15 = arith.constant dense<0.000000e+00> : vector<8x32xf32>
    %30 = tpu.matmul %21, %29, %cst_15 {dimension_numbers = #tpu.dot_dimension_numbers<[1], [0], [0], [1], [0, 0, 1, 1], [], []>} : vector<8x16xf32>, vector<16x32xf32>, vector<8x32xf32> -> vector<8x32xf32>
    %31 = vector.broadcast %23 : vector<8x1xf32> to vector<8x32xf32>
    %32 = arith.mulf %31, %10 : vector<8x32xf32>
    %33 = arith.addf %30, %32 : vector<8x32xf32>
    %34 = vector.broadcast %27 : vector<8x1xf32> to vector<8x32xf32>
    %35 = arith.mulf %33, %34 : vector<8x32xf32>
    %36 = arith.addf %7, %35 : vector<8x32xf32>
    %37 = vector.extract_strided_slice %6 {offsets = [0, 8], sizes = [8, 8], strides = [1, 1]} : vector<8x192xf32> to vector<8x8xf32>
    %38 = vector.extract_strided_slice %6 {offsets = [0, 40], sizes = [8, 8], strides = [1, 1]} : vector<8x192xf32> to vector<8x8xf32>
    %39 = vector.extract_strided_slice %6 {offsets = [0, 96], sizes = [8, 32], strides = [1, 1]} : vector<8x192xf32> to vector<8x32xf32>
    %c8 = arith.constant 8 : index
    %c0_16 = arith.constant 0 : index
    %40 = vector.load %arg18[%c8, %c0_16] : memref<32x16xf32, #tpu.memory_space<vmem>>, vector<8x16xf32>
    %cst_17 = arith.constant dense<0.000000e+00> : vector<8x16xf32>
    %41 = tpu.matmul %37, %40, %cst_17 {dimension_numbers = #tpu.dot_dimension_numbers<[1], [0], [0], [1], [0, 0, 1, 1], [], []>} : vector<8x8xf32>, vector<8x16xf32>, vector<8x16xf32> -> vector<8x16xf32>
    %42 = arith.mulf %37, %38 : vector<8x8xf32>
    %cst_18 = arith.constant dense<0.000000e+00> : vector<8xf32>
    %43 = vector.multi_reduction <add>, %42, %cst_18 [1] : vector<8x8xf32> to vector<8xf32>
    %44 = vector.shape_cast %43 : vector<8xf32> to vector<8x1xf32>
    %cst_19 = arith.constant dense<0xFF800000> : vector<8xf32>
    %45 = vector.multi_reduction <maximumf>, %41, %cst_19 [1] : vector<8x16xf32> to vector<8xf32>
    %46 = vector.shape_cast %45 : vector<8xf32> to vector<8x1xf32>
    %47 = arith.maximumf %46, %44 : vector<8x1xf32>
    %48 = vector.broadcast %47 : vector<8x1xf32> to vector<8x16xf32>
    %49 = arith.subf %41, %48 : vector<8x16xf32>
    %50 = math.exp %49 : vector<8x16xf32>
    %51 = arith.subf %44, %47 : vector<8x1xf32>
    %52 = math.exp %51 : vector<8x1xf32>
    %cst_20 = arith.constant dense<0.000000e+00> : vector<8xf32>
    %53 = vector.multi_reduction <add>, %50, %cst_20 [1] : vector<8x16xf32> to vector<8xf32>
    %54 = vector.shape_cast %53 : vector<8xf32> to vector<8x1xf32>
    %55 = arith.addf %52, %54 : vector<8x1xf32>
    %56 = tpu.reciprocal %55 : vector<8x1xf32> -> vector<8x1xf32>
    %c1 = arith.constant 1 : index
    %c0_21 = arith.constant 0 : index
    %c0_22 = arith.constant 0 : index
    %57 = vector.load %arg19[%c1, %c0_21, %c0_22] : memref<4x16x32xf32, #tpu.memory_space<vmem>>, vector<1x16x32xf32>
    %58 = vector.shape_cast %57 : vector<1x16x32xf32> to vector<16x32xf32>
    %cst_23 = arith.constant dense<0.000000e+00> : vector<8x32xf32>
    %59 = tpu.matmul %50, %58, %cst_23 {dimension_numbers = #tpu.dot_dimension_numbers<[1], [0], [0], [1], [0, 0, 1, 1], [], []>} : vector<8x16xf32>, vector<16x32xf32>, vector<8x32xf32> -> vector<8x32xf32>
    %60 = vector.broadcast %52 : vector<8x1xf32> to vector<8x32xf32>
    %61 = arith.mulf %60, %39 : vector<8x32xf32>
    %62 = arith.addf %59, %61 : vector<8x32xf32>
    %63 = vector.broadcast %56 : vector<8x1xf32> to vector<8x32xf32>
    %64 = arith.mulf %62, %63 : vector<8x32xf32>
    %65 = arith.addf %36, %64 : vector<8x32xf32>
    %66 = vector.extract_strided_slice %6 {offsets = [0, 16], sizes = [8, 8], strides = [1, 1]} : vector<8x192xf32> to vector<8x8xf32>
    %67 = vector.extract_strided_slice %6 {offsets = [0, 48], sizes = [8, 8], strides = [1, 1]} : vector<8x192xf32> to vector<8x8xf32>
    %68 = vector.extract_strided_slice %6 {offsets = [0, 128], sizes = [8, 32], strides = [1, 1]} : vector<8x192xf32> to vector<8x32xf32>
    %c16 = arith.constant 16 : index
    %c0_24 = arith.constant 0 : index
    %69 = vector.load %arg18[%c16, %c0_24] : memref<32x16xf32, #tpu.memory_space<vmem>>, vector<8x16xf32>
    %cst_25 = arith.constant dense<0.000000e+00> : vector<8x16xf32>
    %70 = tpu.matmul %66, %69, %cst_25 {dimension_numbers = #tpu.dot_dimension_numbers<[1], [0], [0], [1], [0, 0, 1, 1], [], []>} : vector<8x8xf32>, vector<8x16xf32>, vector<8x16xf32> -> vector<8x16xf32>
    %71 = arith.mulf %66, %67 : vector<8x8xf32>
    %cst_26 = arith.constant dense<0.000000e+00> : vector<8xf32>
    %72 = vector.multi_reduction <add>, %71, %cst_26 [1] : vector<8x8xf32> to vector<8xf32>
    %73 = vector.shape_cast %72 : vector<8xf32> to vector<8x1xf32>
    %cst_27 = arith.constant dense<0xFF800000> : vector<8xf32>
    %74 = vector.multi_reduction <maximumf>, %70, %cst_27 [1] : vector<8x16xf32> to vector<8xf32>
    %75 = vector.shape_cast %74 : vector<8xf32> to vector<8x1xf32>
    %76 = arith.maximumf %75, %73 : vector<8x1xf32>
    %77 = vector.broadcast %76 : vector<8x1xf32> to vector<8x16xf32>
    %78 = arith.subf %70, %77 : vector<8x16xf32>
    %79 = math.exp %78 : vector<8x16xf32>
    %80 = arith.subf %73, %76 : vector<8x1xf32>
    %81 = math.exp %80 : vector<8x1xf32>
    %cst_28 = arith.constant dense<0.000000e+00> : vector<8xf32>
    %82 = vector.multi_reduction <add>, %79, %cst_28 [1] : vector<8x16xf32> to vector<8xf32>
    %83 = vector.shape_cast %82 : vector<8xf32> to vector<8x1xf32>
    %84 = arith.addf %81, %83 : vector<8x1xf32>
    %85 = tpu.reciprocal %84 : vector<8x1xf32> -> vector<8x1xf32>
    %c2 = arith.constant 2 : index
    %c0_29 = arith.constant 0 : index
    %c0_30 = arith.constant 0 : index
    %86 = vector.load %arg19[%c2, %c0_29, %c0_30] : memref<4x16x32xf32, #tpu.memory_space<vmem>>, vector<1x16x32xf32>
    %87 = vector.shape_cast %86 : vector<1x16x32xf32> to vector<16x32xf32>
    %cst_31 = arith.constant dense<0.000000e+00> : vector<8x32xf32>
    %88 = tpu.matmul %79, %87, %cst_31 {dimension_numbers = #tpu.dot_dimension_numbers<[1], [0], [0], [1], [0, 0, 1, 1], [], []>} : vector<8x16xf32>, vector<16x32xf32>, vector<8x32xf32> -> vector<8x32xf32>
    %89 = vector.broadcast %81 : vector<8x1xf32> to vector<8x32xf32>
    %90 = arith.mulf %89, %68 : vector<8x32xf32>
    %91 = arith.addf %88, %90 : vector<8x32xf32>
    %92 = vector.broadcast %85 : vector<8x1xf32> to vector<8x32xf32>
    %93 = arith.mulf %91, %92 : vector<8x32xf32>
    %94 = arith.addf %65, %93 : vector<8x32xf32>
    %95 = vector.extract_strided_slice %6 {offsets = [0, 24], sizes = [8, 8], strides = [1, 1]} : vector<8x192xf32> to vector<8x8xf32>
    %96 = vector.extract_strided_slice %6 {offsets = [0, 56], sizes = [8, 8], strides = [1, 1]} : vector<8x192xf32> to vector<8x8xf32>
    %97 = vector.extract_strided_slice %6 {offsets = [0, 160], sizes = [8, 32], strides = [1, 1]} : vector<8x192xf32> to vector<8x32xf32>
    %c24 = arith.constant 24 : index
    %c0_32 = arith.constant 0 : index
    %98 = vector.load %arg18[%c24, %c0_32] : memref<32x16xf32, #tpu.memory_space<vmem>>, vector<8x16xf32>
    %cst_33 = arith.constant dense<0.000000e+00> : vector<8x16xf32>
    %99 = tpu.matmul %95, %98, %cst_33 {dimension_numbers = #tpu.dot_dimension_numbers<[1], [0], [0], [1], [0, 0, 1, 1], [], []>} : vector<8x8xf32>, vector<8x16xf32>, vector<8x16xf32> -> vector<8x16xf32>
    %100 = arith.mulf %95, %96 : vector<8x8xf32>
    %cst_34 = arith.constant dense<0.000000e+00> : vector<8xf32>
    %101 = vector.multi_reduction <add>, %100, %cst_34 [1] : vector<8x8xf32> to vector<8xf32>
    %102 = vector.shape_cast %101 : vector<8xf32> to vector<8x1xf32>
    %cst_35 = arith.constant dense<0xFF800000> : vector<8xf32>
    %103 = vector.multi_reduction <maximumf>, %99, %cst_35 [1] : vector<8x16xf32> to vector<8xf32>
    %104 = vector.shape_cast %103 : vector<8xf32> to vector<8x1xf32>
    %105 = arith.maximumf %104, %102 : vector<8x1xf32>
    %106 = vector.broadcast %105 : vector<8x1xf32> to vector<8x16xf32>
    %107 = arith.subf %99, %106 : vector<8x16xf32>
    %108 = math.exp %107 : vector<8x16xf32>
    %109 = arith.subf %102, %105 : vector<8x1xf32>
    %110 = math.exp %109 : vector<8x1xf32>
    %cst_36 = arith.constant dense<0.000000e+00> : vector<8xf32>
    %111 = vector.multi_reduction <add>, %108, %cst_36 [1] : vector<8x16xf32> to vector<8xf32>
    %112 = vector.shape_cast %111 : vector<8xf32> to vector<8x1xf32>
    %113 = arith.addf %110, %112 : vector<8x1xf32>
    %114 = tpu.reciprocal %113 : vector<8x1xf32> -> vector<8x1xf32>
    %c3 = arith.constant 3 : index
    %c0_37 = arith.constant 0 : index
    %c0_38 = arith.constant 0 : index
    %115 = vector.load %arg19[%c3, %c0_37, %c0_38] : memref<4x16x32xf32, #tpu.memory_space<vmem>>, vector<1x16x32xf32>
    %116 = vector.shape_cast %115 : vector<1x16x32xf32> to vector<16x32xf32>
    %cst_39 = arith.constant dense<0.000000e+00> : vector<8x32xf32>
    %117 = tpu.matmul %108, %116, %cst_39 {dimension_numbers = #tpu.dot_dimension_numbers<[1], [0], [0], [1], [0, 0, 1, 1], [], []>} : vector<8x16xf32>, vector<16x32xf32>, vector<8x32xf32> -> vector<8x32xf32>
    %118 = vector.broadcast %110 : vector<8x1xf32> to vector<8x32xf32>
    %119 = arith.mulf %118, %97 : vector<8x32xf32>
    %120 = arith.addf %117, %119 : vector<8x32xf32>
    %121 = vector.broadcast %114 : vector<8x1xf32> to vector<8x32xf32>
    %122 = arith.mulf %120, %121 : vector<8x32xf32>
    %123 = arith.addf %94, %122 : vector<8x32xf32>
    %124 = arith.addf %123, %4 : vector<8x32xf32>
    %c0_40 = arith.constant 0 : index
    %c0_41 = arith.constant 0 : index
    %125 = vector.load %arg9[%c0_40, %c0_41] : memref<1x32xf32, #tpu.memory_space<vmem>>, vector<1x32xf32>
    %c0_42 = arith.constant 0 : index
    %c0_43 = arith.constant 0 : index
    %126 = vector.load %arg10[%c0_42, %c0_43] : memref<1x32xf32, #tpu.memory_space<vmem>>, vector<1x32xf32>
    %cst_44 = arith.constant dense<0.000000e+00> : vector<8xf32>
    %127 = vector.multi_reduction <add>, %124, %cst_44 [1] : vector<8x32xf32> to vector<8xf32>
    %128 = vector.shape_cast %127 : vector<8xf32> to vector<8x1xf32>
    %cst_45 = arith.constant 3.200000e+01 : f32
    %129 = vector.broadcast %cst_45 : f32 to vector<8x1xf32>
    %130 = arith.divf %128, %129 : vector<8x1xf32>
    %131 = vector.broadcast %130 : vector<8x1xf32> to vector<8x32xf32>
    %132 = arith.subf %124, %131 : vector<8x32xf32>
    %133 = arith.mulf %132, %132 : vector<8x32xf32>
    %cst_46 = arith.constant dense<0.000000e+00> : vector<8xf32>
    %134 = vector.multi_reduction <add>, %133, %cst_46 [1] : vector<8x32xf32> to vector<8xf32>
    %135 = vector.shape_cast %134 : vector<8xf32> to vector<8x1xf32>
    %cst_47 = arith.constant 3.200000e+01 : f32
    %136 = vector.broadcast %cst_47 : f32 to vector<8x1xf32>
    %137 = arith.divf %135, %136 : vector<8x1xf32>
    %138 = vector.broadcast %130 : vector<8x1xf32> to vector<8x32xf32>
    %139 = arith.subf %124, %138 : vector<8x32xf32>
    %cst_48 = arith.constant 9.99999997E-7 : f32
    %140 = vector.broadcast %cst_48 : f32 to vector<8x1xf32>
    %141 = arith.addf %137, %140 : vector<8x1xf32>
    %142 = math.rsqrt %141 : vector<8x1xf32>
    %143 = vector.broadcast %142 : vector<8x1xf32> to vector<8x32xf32>
    %144 = arith.mulf %139, %143 : vector<8x32xf32>
    %145 = vector.broadcast %125 : vector<1x32xf32> to vector<8x32xf32>
    %146 = arith.mulf %144, %145 : vector<8x32xf32>
    %147 = vector.broadcast %126 : vector<1x32xf32> to vector<8x32xf32>
    %148 = arith.addf %146, %147 : vector<8x32xf32>
    %c0_49 = arith.constant 0 : index
    %c0_50 = arith.constant 0 : index
    %149 = vector.load %arg11[%c0_49, %c0_50] : memref<32x32xf32, #tpu.memory_space<vmem>>, vector<32x32xf32>
    %cst_51 = arith.constant dense<0.000000e+00> : vector<8x32xf32>
    %150 = tpu.matmul %148, %149, %cst_51 {dimension_numbers = #tpu.dot_dimension_numbers<[1], [0], [0], [1], [0, 0, 1, 1], [], []>} : vector<8x32xf32>, vector<32x32xf32>, vector<8x32xf32> -> vector<8x32xf32>
    %c0_52 = arith.constant 0 : index
    %c0_53 = arith.constant 0 : index
    %151 = vector.load %arg12[%c0_52, %c0_53] : memref<1x32xf32, #tpu.memory_space<vmem>>, vector<1x32xf32>
    %152 = vector.broadcast %151 : vector<1x32xf32> to vector<8x32xf32>
    %153 = arith.addf %150, %152 : vector<8x32xf32>
    %cst_54 = arith.constant 0.000000e+00 : f32
    %154 = vector.broadcast %cst_54 : f32 to vector<8x32xf32>
    %155 = arith.maximumf %153, %154 : vector<8x32xf32>
    %c0_55 = arith.constant 0 : index
    %c0_56 = arith.constant 0 : index
    %156 = vector.load %arg13[%c0_55, %c0_56] : memref<32x32xf32, #tpu.memory_space<vmem>>, vector<32x32xf32>
    %cst_57 = arith.constant dense<0.000000e+00> : vector<8x32xf32>
    %157 = tpu.matmul %155, %156, %cst_57 {dimension_numbers = #tpu.dot_dimension_numbers<[1], [0], [0], [1], [0, 0, 1, 1], [], []>} : vector<8x32xf32>, vector<32x32xf32>, vector<8x32xf32> -> vector<8x32xf32>
    %c0_58 = arith.constant 0 : index
    %c0_59 = arith.constant 0 : index
    %158 = vector.load %arg14[%c0_58, %c0_59] : memref<1x32xf32, #tpu.memory_space<vmem>>, vector<1x32xf32>
    %159 = vector.broadcast %158 : vector<1x32xf32> to vector<8x32xf32>
    %160 = arith.addf %157, %159 : vector<8x32xf32>
    %161 = arith.addf %160, %148 : vector<8x32xf32>
    %c0_60 = arith.constant 0 : index
    %c0_61 = arith.constant 0 : index
    %162 = vector.load %arg15[%c0_60, %c0_61] : memref<1x32xf32, #tpu.memory_space<vmem>>, vector<1x32xf32>
    %c0_62 = arith.constant 0 : index
    %c0_63 = arith.constant 0 : index
    %163 = vector.load %arg16[%c0_62, %c0_63] : memref<1x32xf32, #tpu.memory_space<vmem>>, vector<1x32xf32>
    %cst_64 = arith.constant dense<0.000000e+00> : vector<8xf32>
    %164 = vector.multi_reduction <add>, %161, %cst_64 [1] : vector<8x32xf32> to vector<8xf32>
    %165 = vector.shape_cast %164 : vector<8xf32> to vector<8x1xf32>
    %cst_65 = arith.constant 3.200000e+01 : f32
    %166 = vector.broadcast %cst_65 : f32 to vector<8x1xf32>
    %167 = arith.divf %165, %166 : vector<8x1xf32>
    %168 = vector.broadcast %167 : vector<8x1xf32> to vector<8x32xf32>
    %169 = arith.subf %161, %168 : vector<8x32xf32>
    %170 = arith.mulf %169, %169 : vector<8x32xf32>
    %cst_66 = arith.constant dense<0.000000e+00> : vector<8xf32>
    %171 = vector.multi_reduction <add>, %170, %cst_66 [1] : vector<8x32xf32> to vector<8xf32>
    %172 = vector.shape_cast %171 : vector<8xf32> to vector<8x1xf32>
    %cst_67 = arith.constant 3.200000e+01 : f32
    %173 = vector.broadcast %cst_67 : f32 to vector<8x1xf32>
    %174 = arith.divf %172, %173 : vector<8x1xf32>
    %175 = vector.broadcast %167 : vector<8x1xf32> to vector<8x32xf32>
    %176 = arith.subf %161, %175 : vector<8x32xf32>
    %cst_68 = arith.constant 9.99999997E-7 : f32
    %177 = vector.broadcast %cst_68 : f32 to vector<8x1xf32>
    %178 = arith.addf %174, %177 : vector<8x1xf32>
    %179 = math.rsqrt %178 : vector<8x1xf32>
    %180 = vector.broadcast %179 : vector<8x1xf32> to vector<8x32xf32>
    %181 = arith.mulf %176, %180 : vector<8x32xf32>
    %182 = vector.broadcast %162 : vector<1x32xf32> to vector<8x32xf32>
    %183 = arith.mulf %181, %182 : vector<8x32xf32>
    %184 = vector.broadcast %163 : vector<1x32xf32> to vector<8x32xf32>
    %185 = arith.addf %183, %184 : vector<8x32xf32>
    %c0_69 = arith.constant 0 : index
    %c0_70 = arith.constant 0 : index
    %c0_71 = arith.constant 0 : index
    %186 = vector.load %arg17[%c0_69, %c0_70, %c0_71] : memref<1x8x32xf32, #tpu.memory_space<vmem>>, vector<1x8x32xf32>
    %187 = vector.shape_cast %186 : vector<1x8x32xf32> to vector<8x32xf32>
    %188 = vector.shape_cast %185 : vector<8x32xf32> to vector<1x8x32xf32>
    tpu.vector_store %arg17[%c0_69, %c0_70, %c0_71], %188 {strides = array<i32>} : memref<1x8x32xf32, #tpu.memory_space<vmem>>, vector<1x8x32xf32>,
    return
  }
  func.func @transform_0(%arg0: i32, %arg1: i32) -> (i32, i32, i32) {
    %c0_i32 = arith.constant 0 : i32
    %c0_i32_0 = arith.constant 0 : i32
    return %arg0, %arg1, %c0_i32 : i32, i32, i32
  }
  func.func @transform_1(%arg0: i32, %arg1: i32) -> (i32, i32, i32) {
    %c0_i32 = arith.constant 0 : i32
    %c0_i32_0 = arith.constant 0 : i32
    %c0_i32_1 = arith.constant 0 : i32
    return %arg0, %c0_i32, %c0_i32_0 : i32, i32, i32
  }
  func.func @transform_2(%arg0: i32, %arg1: i32) -> (i32, i32) {
    %c0_i32 = arith.constant 0 : i32
    %c0_i32_0 = arith.constant 0 : i32
    %c0_i32_1 = arith.constant 0 : i32
    return %c0_i32, %c0_i32_0 : i32, i32
  }
  func.func @transform_3(%arg0: i32, %arg1: i32) -> (i32, i32) {
    %c0_i32 = arith.constant 0 : i32
    %c0_i32_0 = arith.constant 0 : i32
    %c0_i32_1 = arith.constant 0 : i32
    return %c0_i32, %c0_i32_0 : i32, i32
  }
  func.func @transform_4(%arg0: i32, %arg1: i32) -> (i32, i32) {
    %c0_i32 = arith.constant 0 : i32
    %c0_i32_0 = arith.constant 0 : i32
    %c0_i32_1 = arith.constant 0 : i32
    return %c0_i32, %c0_i32_0 : i32, i32
  }
  func.func @transform_5(%arg0: i32, %arg1: i32) -> (i32, i32) {
    %c0_i32 = arith.constant 0 : i32
    %c0_i32_0 = arith.constant 0 : i32
    %c0_i32_1 = arith.constant 0 : i32
    return %c0_i32, %c0_i32_0 : i32, i32
  }
  func.func @transform_6(%arg0: i32, %arg1: i32) -> (i32, i32) {
    %c0_i32 = arith.constant 0 : i32
    %c0_i32_0 = arith.constant 0 : i32
    %c0_i32_1 = arith.constant 0 : i32
    return %c0_i32, %c0_i32_0 : i32, i32
  }
  func.func @transform_7(%arg0: i32, %arg1: i32) -> (i32, i32) {
    %c0_i32 = arith.constant 0 : i32
    %c0_i32_0 = arith.constant 0 : i32
    %c0_i32_1 = arith.constant 0 : i32
    return %c0_i32, %c0_i32_0 : i32, i32
  }
  func.func @transform_8(%arg0: i32, %arg1: i32) -> (i32, i32) {
    %c0_i32 = arith.constant 0 : i32
    %c0_i32_0 = arith.constant 0 : i32
    %c0_i32_1 = arith.constant 0 : i32
    return %c0_i32, %c0_i32_0 : i32, i32
  }
  func.func @transform_9(%arg0: i32, %arg1: i32) -> (i32, i32) {
    %c0_i32 = arith.constant 0 : i32
    %c0_i32_0 = arith.constant 0 : i32
    %c0_i32_1 = arith.constant 0 : i32
    return %c0_i32, %c0_i32_0 : i32, i32
  }
  func.func @transform_10(%arg0: i32, %arg1: i32) -> (i32, i32) {
    %c0_i32 = arith.constant 0 : i32
    %c0_i32_0 = arith.constant 0 : i32
    %c0_i32_1 = arith.constant 0 : i32
    return %c0_i32, %c0_i32_0 : i32, i32
  }
  func.func @transform_11(%arg0: i32, %arg1: i32) -> (i32, i32) {
    %c0_i32 = arith.constant 0 : i32
    %c0_i32_0 = arith.constant 0 : i32
    %c0_i32_1 = arith.constant 0 : i32
    return %c0_i32, %c0_i32_0 : i32, i32
  }
  func.func @transform_12(%arg0: i32, %arg1: i32) -> (i32, i32) {
    %c0_i32 = arith.constant 0 : i32
    %c0_i32_0 = arith.constant 0 : i32
    %c0_i32_1 = arith.constant 0 : i32
    return %c0_i32, %c0_i32_0 : i32, i32
  }
  func.func @transform_13(%arg0: i32, %arg1: i32) -> (i32, i32) {
    %c0_i32 = arith.constant 0 : i32
    %c0_i32_0 = arith.constant 0 : i32
    %c0_i32_1 = arith.constant 0 : i32
    return %c0_i32, %c0_i32_0 : i32, i32
  }
  func.func @transform_14(%arg0: i32, %arg1: i32) -> (i32, i32) {
    %c0_i32 = arith.constant 0 : i32
    %c0_i32_0 = arith.constant 0 : i32
    %c0_i32_1 = arith.constant 0 : i32
    return %c0_i32, %c0_i32_0 : i32, i32
  }
  func.func @transform_15(%arg0: i32, %arg1: i32) -> (i32, i32, i32) {
    %c0_i32 = arith.constant 0 : i32
    %c0_i32_0 = arith.constant 0 : i32
    return %arg0, %arg1, %c0_i32 : i32, i32, i32
  }
}

</mosaic_0001>

<llo_original>
// kernel: tpu_custom_call.1
$region0: #{tpu_custom_call.1}
  #allocation0 [shape = 'u32[]', space=smem, size = 0x4, offset = 0x4, fixed_abs, tag = 'smem constant byte address 0x4 - core index']
  #allocation1 [shape = 'u32[144,128]{1,0:T(1,128)}', space=vmem, size = 0x12000, scoped, tag = 'internal scratch']
  #allocation2 [shape = 'f32[32,16]{1,0:T(8,128)}', space=vmem, size = 0x4000, scoped, tag = 'scratch operand']
  #allocation3 [shape = 'f32[4,16,32]{2,1,0:T(8,128)}', space=vmem, size = 0x8000, scoped, tag = 'scratch operand']
  %s0 = inlined_call_operand.hbm [shape: f32[2,8,32], index: 0, kind: input, shape index: {}]
  %s1 = inlined_call_operand.vmem [shape: f32[2,16,64], index: 1, kind: input, shape index: {}]
  %s2 = inlined_call_operand.hbm [shape: f32[32,64], index: 2, kind: input, shape index: {}]
  %s3 = inlined_call_operand.vmem [shape: f32[32,1], index: 3, kind: input, shape index: {}]
  %s4 = inlined_call_operand.hbm [shape: f32[64,128], index: 4, kind: input, shape index: {}]
  %s5 = inlined_call_operand.vmem [shape: f32[1,128], index: 5, kind: input, shape index: {}]
  %s6 = inlined_call_operand.hbm [shape: f32[32,192], index: 6, kind: input, shape index: {}]
  %s7 = inlined_call_operand.vmem [shape: f32[1,32], index: 7, kind: input, shape index: {}]
  %s8 = inlined_call_operand.vmem [shape: f32[1,32], index: 8, kind: input, shape index: {}]
  %s9 = inlined_call_operand.hbm [shape: f32[32,32], index: 9, kind: input, shape index: {}]
  %s10 = inlined_call_operand.vmem [shape: f32[1,32], index: 10, kind: input, shape index: {}]
  %s11 = inlined_call_operand.hbm [shape: f32[32,32], index: 11, kind: input, shape index: {}]
  %s12 = inlined_call_operand.vmem [shape: f32[1,32], index: 12, kind: input, shape index: {}]
  %s13 = inlined_call_operand.vmem [shape: f32[1,32], index: 13, kind: input, shape index: {}]
  %s14 = inlined_call_operand.vmem [shape: f32[1,32], index: 14, kind: input, shape index: {}]
  %s15 = inlined_call_operand.hbm [shape: f32[2,8,32], index: 15, kind: output, shape index: {}]
  %s16 = sld [smem:[#allocation0]]
  $region121: #{tpu_custom_call.1} parent=0
    _
  %s18 = ssub.s32 1, %s16
  %s19 = scalar_select 0, %s18, %s16
  $region1: #{tpu_custom_call.1} parent=0
    #allocation4 [shape = 'u8[8192]{0}', space=vmem, size = 0x2000, scoped, tag = 'input window, operand 0']
    #allocation5 [shape = 's32[2]{0}', space=sflag, size = 0x8, scoped, tag = 'scoped memory for tpu_custom_call.1']
    #allocation6 [shape = 's32[2]{0}', space=sflag, size = 0x8, scoped, tag = 'scoped memory for tpu_custom_call.1']
    #allocation7 [shape = 'u8[16384]{0}', space=vmem, size = 0x4000, scoped, tag = 'input window, operand 2, single buffered']
    #allocation8 [shape = 's32[1]{0}', space=sflag, size = 0x4, scoped, tag = 'scoped memory for tpu_custom_call.1']
    #allocation9 [shape = 'u8[32768]{0}', space=vmem, size = 0x8000, scoped, tag = 'input window, operand 4, single buffered']
    #allocation10 [shape = 'u8[32768]{0}', space=vmem, size = 0x8000, scoped, tag = 'input window, operand 6, single buffered']
    #allocation11 [shape = 's32[1]{0}', space=sflag, size = 0x4, scoped, tag = 'scoped memory for tpu_custom_call.1']
    #allocation12 [shape = 'u8[16384]{0}', space=vmem, size = 0x4000, scoped, tag = 'input window, operand 9, single buffered']
    #allocation13 [shape = 'u8[16384]{0}', space=vmem, size = 0x4000, scoped, tag = 'input window, operand 11, single buffered']
    #allocation14 [shape = 's32[1]{0}', space=sflag, size = 0x4, scoped, tag = 'scoped memory for tpu_custom_call.1']
    #allocation15 [shape = 'u8[8192]{0}', space=vmem, size = 0x2000, scoped, tag = 'output window, operand 0']
    %20 = vsyncpa [#allocation5], 0
    %s21 = scalar_lea.sflag [#allocation5], 1
    %22 = vsyncpa %s21, 0
    %23 = vsyncpa [#allocation8], 0
    %24 = vsyncpa [#allocation11], 0
    %25 = vsyncpa [#allocation14], 0
    %26 = vsyncpa [#allocation6], 0
    %s27 = scalar_lea.sflag [#allocation6], 1
    %28 = vsyncpa %s27, 0
    loop: start=0, step=1, limit=4
    $region2: #{tpu_custom_call.1} parent=1 // loop_pre_header
      _
    $region3: #{tpu_custom_call.1} parent=1 // loop_header
      %s30 = sphi 0, %s34
      %p31 = scmp.ge.s32.totalorder %s30, 4
      %s37 = sphi 0, %s49
      %s38 = sphi 0, %s45
      %s39 = sphi 0, %s37
      %s40 = sphi 0, %s38
      %s41 = sphi 0, %s39
      %s42 = sphi 0, %s40
      %s54 = sphi 0, %s56
      %s57 = sphi 0, %s54
      %s58 = sphi 0, %s57
      %s74 = sphi 0, %s58
      %s80 = sphi 0, %s82
      %s83 = sphi 0, %s80
      %s84 = sphi 0, %s83
      %s100 = sphi 0, %s84
      %s104 = sphi 0, %s104
      %s106 = sphi 0, %s104
      %s107 = sphi 0, %s106
      %s121 = sphi 0, %s107
      %s125 = sphi 0, %s125
      %s127 = sphi 0, %s125
      %s128 = sphi 0, %s127
      %s142 = sphi 0, %s128
      %s146 = sphi 0, %s146
      %s148 = sphi 0, %s146
      %s149 = sphi 0, %s148
      %s163 = sphi 0, %s149
      %s167 = sphi 0, %s167
      %s169 = sphi 0, %s167
      %s170 = sphi 0, %s169
      %s184 = sphi 0, %s170
      %s188 = sphi 0, %s188
      %s190 = sphi 0, %s188
      %s191 = sphi 0, %s190
      %s205 = sphi 0, %s191
      %s209 = sphi 0, %s209
      %s211 = sphi 0, %s209
      %s212 = sphi 0, %s211
      %s226 = sphi 0, %s212
      %s230 = sphi 0, %s230
      %s232 = sphi 0, %s230
      %s233 = sphi 0, %s232
      %s247 = sphi 0, %s233
      %s251 = sphi 0, %s251
      %s253 = sphi 0, %s251
      %s254 = sphi 0, %s253
      %s268 = sphi 0, %s254
      %s272 = sphi 0, %s272
      %s274 = sphi 0, %s272
      %s275 = sphi 0, %s274
      %s289 = sphi 0, %s275
      %s293 = sphi 0, %s293
      %s295 = sphi 0, %s293
      %s296 = sphi 0, %s295
      %s310 = sphi 0, %s296
      %s314 = sphi 0, %s314
      %s316 = sphi 0, %s314
      %s317 = sphi 0, %s316
      %s331 = sphi 0, %s317
      %s335 = sphi 0, %s335
      %s337 = sphi 0, %s335
      %s338 = sphi 0, %s337
      %s352 = sphi 0, %s338
      %s356 = sphi 0, %s356
      %s358 = sphi 0, %s356
      %s359 = sphi 0, %s358
      %s373 = sphi 0, %s359
      %s381 = sphi 0, %s383
      %s384 = sphi 0, %s381
      %s385 = sphi 0, %s384
      %s401 = sphi 0, %s385
    $region4: #{tpu_custom_call.1} parent=1 // loop_header_branch
      %33 = sbr.rel (%p31) target = $region8
    $region5: #{tpu_custom_call.1} parent=1 // loop_body
      %s35 = ssub.s32 %s30, 1
      %s36 = ssub.s32 %s30, 2
      %s43 = sadd.s32 1, %s38
      %p44 = scmp.ge.s32.totalorder %s43, 1
      %s45 = scalar_select %p44, 0, %s43
      %s46 = sadd.s32 1, %s37
      %s47 = scalar_select %p44, %s46, %s37
      %p48 = scmp.ge.s32.totalorder %s47, 2
      %s49 = scalar_select %p48, 0, %s47
      %s50 = ssub.s32 %s37, %s49
      %s51 = ssub.s32 %s38, %s45
      %s52 = sor.u32 %s50, %s51
      %p53 = scmp.eq.s32.totalorder %s52, 0
      %s55 = sadd.s32 %s54, 1
      %s56 = scalar_select %p53, %s54, %s55
      %p59 = pneg %p53
      %p60 = scmp.eq.s32.totalorder %s30, 1
      %p61 = por %p59, %p60
      %p62 = scmp.ne.s32.totalorder %s54, %s57
      %p63 = scmp.eq.s32.totalorder %s30, 0
      %p64 = por %p62, %p63
      %p65 = scmp.ne.s32.totalorder %s54, %s57
      %p66 = scmp.eq.s32.totalorder %s35, 1
      %p67 = por %p65, %p66
      %p68 = scmp.ne.s32.totalorder %s57, %s58
      %p69 = scmp.eq.s32.totalorder %s35, 0
      %p70 = por %p68, %p69
      %p71 = scmp.ne.s32.totalorder %s57, %s58
      %p72 = scmp.eq.s32.totalorder %s36, 1
      %p73 = por %p71, %p72
      %p75 = scmp.ne.s32.totalorder %s58, %s74
      %p76 = scmp.eq.s32.totalorder %s36, 0
      %p77 = por %p75, %p76
      %s78 = ssub.s32 %s37, %s49
      %p79 = scmp.eq.s32.totalorder %s78, 0
      %s81 = sadd.s32 %s80, 1
      %s82 = scalar_select %p79, %s80, %s81
      %p85 = pneg %p79
      %p86 = scmp.eq.s32.totalorder %s30, 1
      %p87 = por %p85, %p86
      %p88 = scmp.ne.s32.totalorder %s80, %s83
      %p89 = scmp.eq.s32.totalorder %s30, 0
      %p90 = por %p88, %p89
      %p91 = scmp.ne.s32.totalorder %s80, %s83
      %p92 = scmp.eq.s32.totalorder %s35, 1
      %p93 = por %p91, %p92
      %p94 = scmp.ne.s32.totalorder %s83, %s84
      %p95 = scmp.eq.s32.totalorder %s35, 0
      %p96 = por %p94, %p95
      %p97 = scmp.ne.s32.totalorder %s83, %s84
      %p98 = scmp.eq.s32.totalorder %s36, 1
      %p99 = por %p97, %p98
      %p101 = scmp.ne.s32.totalorder %s84, %s100
      %p102 = scmp.eq.s32.totalorder %s36, 0
      %p103 = por %p101, %p102
      %s105 = sadd.s32 %s104, 1
      %p108 = scmp.eq.s32.totalorder %s30, 1
      %p109 = scmp.ne.s32.totalorder %s104, %s106
      %p110 = scmp.eq.s32.totalorder %s30, 0
      %p111 = por %p109, %p110
      %p112 = scmp.ne.s32.totalorder %s104, %s106
      %p113 = scmp.eq.s32.totalorder %s35, 1
      %p114 = por %p112, %p113
      %p115 = scmp.ne.s32.totalorder %s106, %s107
      %p116 = scmp.eq.s32.totalorder %s35, 0
      %p117 = por %p115, %p116
      %p118 = scmp.ne.s32.totalorder %s106, %s107
      %p119 = scmp.eq.s32.totalorder %s36, 1
      %p120 = por %p118, %p119
      %p122 = scmp.ne.s32.totalorder %s107, %s121
      %p123 = scmp.eq.s32.totalorder %s36, 0
      %p124 = por %p122, %p123
      %s126 = sadd.s32 %s125, 1
      %p129 = scmp.eq.s32.totalorder %s30, 1
      %p130 = scmp.ne.s32.totalorder %s125, %s127
      %p131 = scmp.eq.s32.totalorder %s30, 0
      %p132 = por %p130, %p131
      %p133 = scmp.ne.s32.totalorder %s125, %s127
      %p134 = scmp.eq.s32.totalorder %s35, 1
      %p135 = por %p133, %p134
      %p136 = scmp.ne.s32.totalorder %s127, %s128
      %p137 = scmp.eq.s32.totalorder %s35, 0
      %p138 = por %p136, %p137
      %p139 = scmp.ne.s32.totalorder %s127, %s128
      %p140 = scmp.eq.s32.totalorder %s36, 1
      %p141 = por %p139, %p140
      %p143 = scmp.ne.s32.totalorder %s128, %s142
      %p144 = scmp.eq.s32.totalorder %s36, 0
      %p145 = por %p143, %p144
      %s147 = sadd.s32 %s146, 1
      %p150 = scmp.eq.s32.totalorder %s30, 1
      %p151 = scmp.ne.s32.totalorder %s146, %s148
      %p152 = scmp.eq.s32.totalorder %s30, 0
      %p153 = por %p151, %p152
      %p154 = scmp.ne.s32.totalorder %s146, %s148
      %p155 = scmp.eq.s32.totalorder %s35, 1
      %p156 = por %p154, %p155
      %p157 = scmp.ne.s32.totalorder %s148, %s149
      %p158 = scmp.eq.s32.totalorder %s35, 0
      %p159 = por %p157, %p158
      %p160 = scmp.ne.s32.totalorder %s148, %s149
      %p161 = scmp.eq.s32.totalorder %s36, 1
      %p162 = por %p160, %p161
      %p164 = scmp.ne.s32.totalorder %s149, %s163
      %p165 = scmp.eq.s32.totalorder %s36, 0
      %p166 = por %p164, %p165
      %s168 = sadd.s32 %s167, 1
      %p171 = scmp.eq.s32.totalorder %s30, 1
      %p172 = scmp.ne.s32.totalorder %s167, %s169
      %p173 = scmp.eq.s32.totalorder %s30, 0
      %p174 = por %p172, %p173
      %p175 = scmp.ne.s32.totalorder %s167, %s169
      %p176 = scmp.eq.s32.totalorder %s35, 1
      %p177 = por %p175, %p176
      %p178 = scmp.ne.s32.totalorder %s169, %s170
      %p179 = scmp.eq.s32.totalorder %s35, 0
      %p180 = por %p178, %p179
      %p181 = scmp.ne.s32.totalorder %s169, %s170
      %p182 = scmp.eq.s32.totalorder %s36, 1
      %p183 = por %p181, %p182
      %p185 = scmp.ne.s32.totalorder %s170, %s184
      %p186 = scmp.eq.s32.totalorder %s36, 0
      %p187 = por %p185, %p186
      %s189 = sadd.s32 %s188, 1
      %p192 = scmp.eq.s32.totalorder %s30, 1
      %p193 = scmp.ne.s32.totalorder %s188, %s190
      %p194 = scmp.eq.s32.totalorder %s30, 0
      %p195 = por %p193, %p194
      %p196 = scmp.ne.s32.totalorder %s188, %s190
      %p197 = scmp.eq.s32.totalorder %s35, 1
      %p198 = por %p196, %p197
      %p199 = scmp.ne.s32.totalorder %s190, %s191
      %p200 = scmp.eq.s32.totalorder %s35, 0
      %p201 = por %p199, %p200
      %p202 = scmp.ne.s32.totalorder %s190, %s191
      %p203 = scmp.eq.s32.totalorder %s36, 1
      %p204 = por %p202, %p203
      %p206 = scmp.ne.s32.totalorder %s191, %s205
      %p207 = scmp.eq.s32.totalorder %s36, 0
      %p208 = por %p206, %p207
      %s210 = sadd.s32 %s209, 1
      %p213 = scmp.eq.s32.totalorder %s30, 1
      %p214 = scmp.ne.s32.totalorder %s209, %s211
      %p215 = scmp.eq.s32.totalorder %s30, 0
      %p216 = por %p214, %p215
      %p217 = scmp.ne.s32.totalorder %s209, %s211
      %p218 = scmp.eq.s32.totalorder %s35, 1
      %p219 = por %p217, %p218
      %p220 = scmp.ne.s32.totalorder %s211, %s212
      %p221 = scmp.eq.s32.totalorder %s35, 0
      %p222 = por %p220, %p221
      %p223 = scmp.ne.s32.totalorder %s211, %s212
      %p224 = scmp.eq.s32.totalorder %s36, 1
      %p225 = por %p223, %p224
      %p227 = scmp.ne.s32.totalorder %s212, %s226
      %p228 = scmp.eq.s32.totalorder %s36, 0
      %p229 = por %p227, %p228
      %s231 = sadd.s32 %s230, 1
      %p234 = scmp.eq.s32.totalorder %s30, 1
      %p235 = scmp.ne.s32.totalorder %s230, %s232
      %p236 = scmp.eq.s32.totalorder %s30, 0
      %p237 = por %p235, %p236
      %p238 = scmp.ne.s32.totalorder %s230, %s232
      %p239 = scmp.eq.s32.totalorder %s35, 1
      %p240 = por %p238, %p239
      %p241 = scmp.ne.s32.totalorder %s232, %s233
      %p242 = scmp.eq.s32.totalorder %s35, 0
      %p243 = por %p241, %p242
      %p244 = scmp.ne.s32.totalorder %s232, %s233
      %p245 = scmp.eq.s32.totalorder %s36, 1
      %p246 = por %p244, %p245
      %p248 = scmp.ne.s32.totalorder %s233, %s247
      %p249 = scmp.eq.s32.totalorder %s36, 0
      %p250 = por %p248, %p249
      %s252 = sadd.s32 %s251, 1
      %p255 = scmp.eq.s32.totalorder %s30, 1
      %p256 = scmp.ne.s32.totalorder %s251, %s253
      %p257 = scmp.eq.s32.totalorder %s30, 0
      %p258 = por %p256, %p257
      %p259 = scmp.ne.s32.totalorder %s251, %s253
      %p260 = scmp.eq.s32.totalorder %s35, 1
      %p261 = por %p259, %p260
      %p262 = scmp.ne.s32.totalorder %s253, %s254
      %p263 = scmp.eq.s32.totalorder %s35, 0
      %p264 = por %p262, %p263
      %p265 = scmp.ne.s32.totalorder %s253, %s254
      %p266 = scmp.eq.s32.totalorder %s36, 1
      %p267 = por %p265, %p266
      %p269 = scmp.ne.s32.totalorder %s254, %s268
      %p270 = scmp.eq.s32.totalorder %s36, 0
      %p271 = por %p269, %p270
      %s273 = sadd.s32 %s272, 1
      %p276 = scmp.eq.s32.totalorder %s30, 1
      %p277 = scmp.ne.s32.totalorder %s272, %s274
      %p278 = scmp.eq.s32.totalorder %s30, 0
      %p279 = por %p277, %p278
      %p280 = scmp.ne.s32.totalorder %s272, %s274
      %p281 = scmp.eq.s32.totalorder %s35, 1
      %p282 = por %p280, %p281
      %p283 = scmp.ne.s32.totalorder %s274, %s275
      %p284 = scmp.eq.s32.totalorder %s35, 0
      %p285 = por %p283, %p284
      %p286 = scmp.ne.s32.totalorder %s274, %s275
      %p287 = scmp.eq.s32.totalorder %s36, 1
      %p288 = por %p286, %p287
      %p290 = scmp.ne.s32.totalorder %s275, %s289
      %p291 = scmp.eq.s32.totalorder %s36, 0
      %p292 = por %p290, %p291
      %s294 = sadd.s32 %s293, 1
      %p297 = scmp.eq.s32.totalorder %s30, 1
      %p298 = scmp.ne.s32.totalorder %s293, %s295
      %p299 = scmp.eq.s32.totalorder %s30, 0
      %p300 = por %p298, %p299
      %p301 = scmp.ne.s32.totalorder %s293, %s295
      %p302 = scmp.eq.s32.totalorder %s35, 1
      %p303 = por %p301, %p302
      %p304 = scmp.ne.s32.totalorder %s295, %s296
      %p305 = scmp.eq.s32.totalorder %s35, 0
      %p306 = por %p304, %p305
      %p307 = scmp.ne.s32.totalorder %s295, %s296
      %p308 = scmp.eq.s32.totalorder %s36, 1
      %p309 = por %p307, %p308
      %p311 = scmp.ne.s32.totalorder %s296, %s310
      %p312 = scmp.eq.s32.totalorder %s36, 0
      %p313 = por %p311, %p312
      %s315 = sadd.s32 %s314, 1
      %p318 = scmp.eq.s32.totalorder %s30, 1
      %p319 = scmp.ne.s32.totalorder %s314, %s316
      %p320 = scmp.eq.s32.totalorder %s30, 0
      %p321 = por %p319, %p320
      %p322 = scmp.ne.s32.totalorder %s314, %s316
      %p323 = scmp.eq.s32.totalorder %s35, 1
      %p324 = por %p322, %p323
      %p325 = scmp.ne.s32.totalorder %s316, %s317
      %p326 = scmp.eq.s32.totalorder %s35, 0
      %p327 = por %p325, %p326
      %p328 = scmp.ne.s32.totalorder %s316, %s317
      %p329 = scmp.eq.s32.totalorder %s36, 1
      %p330 = por %p328, %p329
      %p332 = scmp.ne.s32.totalorder %s317, %s331
      %p333 = scmp.eq.s32.totalorder %s36, 0
      %p334 = por %p332, %p333
      %s336 = sadd.s32 %s335, 1
      %p339 = scmp.eq.s32.totalorder %s30, 1
      %p340 = scmp.ne.s32.totalorder %s335, %s337
      %p341 = scmp.eq.s32.totalorder %s30, 0
      %p342 = por %p340, %p341
      %p343 = scmp.ne.s32.totalorder %s335, %s337
      %p344 = scmp.eq.s32.totalorder %s35, 1
      %p345 = por %p343, %p344
      %p346 = scmp.ne.s32.totalorder %s337, %s338
      %p347 = scmp.eq.s32.totalorder %s35, 0
      %p348 = por %p346, %p347
      %p349 = scmp.ne.s32.totalorder %s337, %s338
      %p350 = scmp.eq.s32.totalorder %s36, 1
      %p351 = por %p349, %p350
      %p353 = scmp.ne.s32.totalorder %s338, %s352
      %p354 = scmp.eq.s32.totalorder %s36, 0
      %p355 = por %p353, %p354
      %s357 = sadd.s32 %s356, 1
      %p360 = scmp.eq.s32.totalorder %s30, 1
      %p361 = scmp.ne.s32.totalorder %s356, %s358
      %p362 = scmp.eq.s32.totalorder %s30, 0
      %p363 = por %p361, %p362
      %p364 = scmp.ne.s32.totalorder %s356, %s358
      %p365 = scmp.eq.s32.totalorder %s35, 1
      %p366 = por %p364, %p365
      %p367 = scmp.ne.s32.totalorder %s358, %s359
      %p368 = scmp.eq.s32.totalorder %s35, 0
      %p369 = por %p367, %p368
      %p370 = scmp.ne.s32.totalorder %s358, %s359
      %p371 = scmp.eq.s32.totalorder %s36, 1
      %p372 = por %p370, %p371
      %p374 = scmp.ne.s32.totalorder %s359, %s373
      %p375 = scmp.eq.s32.totalorder %s36, 0
      %p376 = por %p374, %p375
      %s377 = ssub.s32 %s37, %s49
      %s378 = ssub.s32 %s38, %s45
      %s379 = sor.u32 %s377, %s378
      %p380 = scmp.eq.s32.totalorder %s379, 0
      %s382 = sadd.s32 %s381, 1
      %s383 = scalar_select %p380, %s381, %s382
      %p386 = pneg %p380
      %p387 = scmp.eq.s32.totalorder %s30, 1
      %p388 = por %p386, %p387
      %p389 = scmp.ne.s32.totalorder %s381, %s384
      %p390 = scmp.eq.s32.totalorder %s30, 0
      %p391 = por %p389, %p390
      %p392 = scmp.ne.s32.totalorder %s381, %s384
      %p393 = scmp.eq.s32.totalorder %s35, 1
      %p394 = por %p392, %p393
      %p395 = scmp.ne.s32.totalorder %s384, %s385
      %p396 = scmp.eq.s32.totalorder %s35, 0
      %p397 = por %p395, %p396
      %p398 = scmp.ne.s32.totalorder %s384, %s385
      %p399 = scmp.eq.s32.totalorder %s36, 1
      %p400 = por %p398, %p399
      %p402 = scmp.ne.s32.totalorder %s385, %s401
      %p403 = scmp.eq.s32.totalorder %s36, 0
      %p404 = por %p402, %p403
      %p405 = scmp.le.s32.totalorder 1, %s30
      %p406 = scmp.lt.s32.totalorder %s30, 3
      %p407 = pnand %p405, %p406
      %p408 = pneg %p407
      // Predicated region
      $region9: #{tpu_custom_call.1} parent=5 // pred_check
        _
      $region10: #{tpu_custom_call.1} parent=5 // pred_check_branch
        %410 = sbr.rel (%p407) target = $region12
      $region11: #{tpu_custom_call.1} parent=5 // pred_region
        %s411 = ssub.s32 %s30, 1
        // Predicated region
        $region13: #{tpu_custom_call.1} parent=11 // pred_check
          %p412 = pneg %p117
        $region14: #{tpu_custom_call.1} parent=11 // pred_check_branch
          %414 = sbr.rel (%p412) target = $region16
        $region15: #{tpu_custom_call.1} parent=11 // pred_region
          %s416 = ssub.s32 512, 512
          %417 = vsyncadd [#allocation8], %s416
          %s418 = sshll.u32 [#allocation7], 4
          %s419 = int_to_ptr.vmem [resolvable:$true] %s418
          %424 = dma.hbm_to_vmem [thread:$0]  %s2, 512, %s419, [#allocation8], 128, 128, 8
        $region16: #{tpu_custom_call.1} parent=11 // pred_fallthru
          _
        // Predicated region
        $region17: #{tpu_custom_call.1} parent=11 // pred_check
          %p425 = pneg %p138
        $region18: #{tpu_custom_call.1} parent=11 // pred_check_branch
          %427 = sbr.rel (%p425) target = $region20
        $region19: #{tpu_custom_call.1} parent=11 // pred_region
          _
        $region20: #{tpu_custom_call.1} parent=11 // pred_fallthru
          _
        // Predicated region
        $region21: #{tpu_custom_call.1} parent=11 // pred_check
          %p428 = pneg %p159
        $region22: #{tpu_custom_call.1} parent=11 // pred_check_branch
          %430 = sbr.rel (%p428) target = $region24
        $region23: #{tpu_custom_call.1} parent=11 // pred_region
          %s432 = ssub.s32 1024, 1024
          %433 = vsyncadd [#allocation8], %s432
          %s434 = sshll.u32 [#allocation9], 4
          %s435 = int_to_ptr.vmem [resolvable:$true] %s434
          %440 = dma.hbm_to_vmem [thread:$0]  %s4, 1024, %s435, [#allocation8], 128, 128, 8
        $region24: #{tpu_custom_call.1} parent=11 // pred_fallthru
          _
        // Predicated region
        $region25: #{tpu_custom_call.1} parent=11 // pred_check
          %p441 = pneg %p180
        $region26: #{tpu_custom_call.1} parent=11 // pred_check_branch
          %443 = sbr.rel (%p441) target = $region28
        $region27: #{tpu_custom_call.1} parent=11 // pred_region
          _
        $region28: #{tpu_custom_call.1} parent=11 // pred_fallthru
          _
        // Predicated region
        $region29: #{tpu_custom_call.1} parent=11 // pred_check
          %p444 = pneg %p201
        $region30: #{tpu_custom_call.1} parent=11 // pred_check_branch
          %446 = sbr.rel (%p444) target = $region32
        $region31: #{tpu_custom_call.1} parent=11 // pred_region
          %s448 = ssub.s32 1024, 1024
          %449 = vsyncadd [#allocation11], %s448
          %s450 = sshll.u32 [#allocation10], 4
          %s451 = int_to_ptr.vmem [resolvable:$true] %s450
          %456 = dma.hbm_to_vmem [thread:$0]  %s6, 1024, %s451, [#allocation11], 256, 256, 16
        $region32: #{tpu_custom_call.1} parent=11 // pred_fallthru
          _
        // Predicated region
        $region33: #{tpu_custom_call.1} parent=11 // pred_check
          %p457 = pneg %p222
        $region34: #{tpu_custom_call.1} parent=11 // pred_check_branch
          %459 = sbr.rel (%p457) target = $region36
        $region35: #{tpu_custom_call.1} parent=11 // pred_region
          _
        $region36: #{tpu_custom_call.1} parent=11 // pred_fallthru
          _
        // Predicated region
        $region37: #{tpu_custom_call.1} parent=11 // pred_check
          %p460 = pneg %p243
        $region38: #{tpu_custom_call.1} parent=11 // pred_check_branch
          %462 = sbr.rel (%p460) target = $region40
        $region39: #{tpu_custom_call.1} parent=11 // pred_region
          _
        $region40: #{tpu_custom_call.1} parent=11 // pred_fallthru
          _
        // Predicated region
        $region41: #{tpu_custom_call.1} parent=11 // pred_check
          %p463 = pneg %p264
        $region42: #{tpu_custom_call.1} parent=11 // pred_check_branch
          %465 = sbr.rel (%p463) target = $region44
        $region43: #{tpu_custom_call.1} parent=11 // pred_region
          %s467 = ssub.s32 512, 512
          %468 = vsyncadd [#allocation11], %s467
          %s469 = sshll.u32 [#allocation12], 4
          %s470 = int_to_ptr.vmem [resolvable:$true] %s469
          %475 = dma.hbm_to_vmem [thread:$0]  %s9, 512, %s470, [#allocation11], 128, 128, 8
        $region44: #{tpu_custom_call.1} parent=11 // pred_fallthru
          _
        // Predicated region
        $region45: #{tpu_custom_call.1} parent=11 // pred_check
          %p476 = pneg %p285
        $region46: #{tpu_custom_call.1} parent=11 // pred_check_branch
          %478 = sbr.rel (%p476) target = $region48
        $region47: #{tpu_custom_call.1} parent=11 // pred_region
          _
        $region48: #{tpu_custom_call.1} parent=11 // pred_fallthru
          _
        // Predicated region
        $region49: #{tpu_custom_call.1} parent=11 // pred_check
          %p479 = pneg %p306
        $region50: #{tpu_custom_call.1} parent=11 // pred_check_branch
          %481 = sbr.rel (%p479) target = $region52
        $region51: #{tpu_custom_call.1} parent=11 // pred_region
          %s483 = ssub.s32 512, 512
          %484 = vsyncadd [#allocation14], %s483
          %s485 = sshll.u32 [#allocation13], 4
          %s486 = int_to_ptr.vmem [resolvable:$true] %s485
          %491 = dma.hbm_to_vmem [thread:$0]  %s11, 512, %s486, [#allocation14], 128, 128, 8
        $region52: #{tpu_custom_call.1} parent=11 // pred_fallthru
          _
        // Predicated region
        $region53: #{tpu_custom_call.1} parent=11 // pred_check
          %p492 = pneg %p327
        $region54: #{tpu_custom_call.1} parent=11 // pred_check_branch
          %494 = sbr.rel (%p492) target = $region56
        $region55: #{tpu_custom_call.1} parent=11 // pred_region
          _
        $region56: #{tpu_custom_call.1} parent=11 // pred_fallthru
          _
        // Predicated region
        $region57: #{tpu_custom_call.1} parent=11 // pred_check
          %p495 = pneg %p348
        $region58: #{tpu_custom_call.1} parent=11 // pred_check_branch
          %497 = sbr.rel (%p495) target = $region60
        $region59: #{tpu_custom_call.1} parent=11 // pred_region
          _
        $region60: #{tpu_custom_call.1} parent=11 // pred_fallthru
          _
        // Predicated region
        $region61: #{tpu_custom_call.1} parent=11 // pred_check
          %p498 = pneg %p369
        $region62: #{tpu_custom_call.1} parent=11 // pred_check_branch
          %500 = sbr.rel (%p498) target = $region64
        $region63: #{tpu_custom_call.1} parent=11 // pred_region
          _
        $region64: #{tpu_custom_call.1} parent=11 // pred_fallthru
          _
      $region12: #{tpu_custom_call.1} parent=5 // pred_fallthru
        _
      %p501 = scmp.lt.s32.totalorder %s30, 2
      // Predicated region
      $region65: #{tpu_custom_call.1} parent=5 // pred_check
        %p502 = pneg %p501
      $region66: #{tpu_custom_call.1} parent=5 // pred_check_branch
        %504 = sbr.rel (%p502) target = $region68
      $region67: #{tpu_custom_call.1} parent=5 // pred_region
        // Predicated region
        $region69: #{tpu_custom_call.1} parent=67 // pred_check
          %p505 = pneg %p64
        $region70: #{tpu_custom_call.1} parent=67 // pred_check_branch
          %507 = sbr.rel (%p505) target = $region72
        $region71: #{tpu_custom_call.1} parent=67 // pred_region
          %s508 = sand.u32 %s54, 1
          %s509 = scalar_lea.sflag [#allocation5], %s508
          %s510 = sand.u32 %s54, 1
          %s511 = smul.addr %s510, 8
          %s512 = scalar_lea.vmem [#allocation4], %s511
          %s514 = ssub.s32 128, 128
          %515 = vsyncadd %s509, %s514
          %s516 = sadd.s32 %s38, %s37
          %s517 = smul.addr %s516, 128
          %s518 = scalar_lea.hbm %s0, %s517
          %s520 = sshll.u32 %s512, 4
          %s521 = int_to_ptr.vmem [resolvable:$true] %s520
          %523 = dma.hbm_to_vmem [thread:$0]  %s518, 128, %s521, %s509
        $region72: #{tpu_custom_call.1} parent=67 // pred_fallthru
          _
        // Predicated region
        $region73: #{tpu_custom_call.1} parent=67 // pred_check
          %p524 = pneg %p90
        $region74: #{tpu_custom_call.1} parent=67 // pred_check_branch
          %526 = sbr.rel (%p524) target = $region76
        $region75: #{tpu_custom_call.1} parent=67 // pred_region
          %p527 = scmp.lt.s32.totalorder %s37, 1
          %s528 = scalar_select %p527, %s37, 1
          %s529 = smul.addr %s528, 2
          %s530 = smul.addr %s529, 8
          %s531 = scalar_lea.vmem %s1, %s530
        $region76: #{tpu_custom_call.1} parent=67 // pred_fallthru
          _
      $region68: #{tpu_custom_call.1} parent=5 // pred_fallthru
        _
      %p532 = scmp.le.s32.totalorder 1, %s30
      %p533 = scmp.lt.s32.totalorder %s30, 3
      %p534 = pnand %p532, %p533
      %p535 = pneg %p534
      // Predicated region
      $region77: #{tpu_custom_call.1} parent=5 // pred_check
        _
      $region78: #{tpu_custom_call.1} parent=5 // pred_check_branch
        %537 = sbr.rel (%p534) target = $region80
      $region79: #{tpu_custom_call.1} parent=5 // pred_region
        %s538 = ssub.s32 %s30, 1
        %s539 = sand.u32 %s57, 1
        %s540 = scalar_lea.sflag [#allocation5], %s539
        %s541 = sand.u32 %s57, 1
        %s542 = smul.addr %s541, 8
        %s543 = scalar_lea.vmem [#allocation4], %s542
        // Predicated region
        $region81: #{tpu_custom_call.1} parent=79 // pred_check
          %p544 = pneg %p70
        $region82: #{tpu_custom_call.1} parent=79 // pred_check_branch
          %546 = sbr.rel (%p544) target = $region84
        $region83: #{tpu_custom_call.1} parent=79 // pred_region
          %547 = dma.done %s540, 128
        $region84: #{tpu_custom_call.1} parent=79 // pred_fallthru
          _
        // Predicated region
        $region85: #{tpu_custom_call.1} parent=79 // pred_check
          %p548 = pneg %p117
        $region86: #{tpu_custom_call.1} parent=79 // pred_check_branch
          %550 = sbr.rel (%p548) target = $region88
        $region87: #{tpu_custom_call.1} parent=79 // pred_region
          %551 = dma.done [#allocation8], 512
        $region88: #{tpu_custom_call.1} parent=79 // pred_fallthru
          _
        // Predicated region
        $region89: #{tpu_custom_call.1} parent=79 // pred_check
          %p552 = pneg %p159
        $region90: #{tpu_custom_call.1} parent=79 // pred_check_branch
          %554 = sbr.rel (%p552) target = $region92
        $region91: #{tpu_custom_call.1} parent=79 // pred_region
          %555 = dma.done [#allocation8], 1024
        $region92: #{tpu_custom_call.1} parent=79 // pred_fallthru
          _
        // Predicated region
        $region93: #{tpu_custom_call.1} parent=79 // pred_check
          %p556 = pneg %p201
        $region94: #{tpu_custom_call.1} parent=79 // pred_check_branch
          %558 = sbr.rel (%p556) target = $region96
        $region95: #{tpu_custom_call.1} parent=79 // pred_region
          %559 = dma.done [#allocation11], 1024
        $region96: #{tpu_custom_call.1} parent=79 // pred_fallthru
          _
        // Predicated region
        $region97: #{tpu_custom_call.1} parent=79 // pred_check
          %p560 = pneg %p264
        $region98: #{tpu_custom_call.1} parent=79 // pred_check_branch
          %562 = sbr.rel (%p560) target = $region100
        $region99: #{tpu_custom_call.1} parent=79 // pred_region
          %563 = dma.done [#allocation11], 512
        $region100: #{tpu_custom_call.1} parent=79 // pred_fallthru
          _
        // Predicated region
        $region101: #{tpu_custom_call.1} parent=79 // pred_check
          %p564 = pneg %p306
        $region102: #{tpu_custom_call.1} parent=79 // pred_check_branch
          %566 = sbr.rel (%p564) target = $region104
        $region103: #{tpu_custom_call.1} parent=79 // pred_region
          %567 = dma.done [#allocation14], 512
        $region104: #{tpu_custom_call.1} parent=79 // pred_fallthru
          _
        %s568 = sand.u32 %s57, 1
        %s569 = scalar_lea.sflag [#allocation5], %s568
        %s570 = sand.u32 %s57, 1
        %s571 = smul.addr %s570, 8
        %s572 = scalar_lea.vmem [#allocation4], %s571
        %p573 = pneg %p70
        %p574 = pneg %p67
        %p575 = scmp.lt.s32.totalorder %s39, 1
        %s576 = scalar_select %p575, %s39, 1
        %s577 = smul.addr %s576, 2
        %s578 = smul.addr %s577, 8
        %s579 = scalar_lea.vmem %s1, %s578
        %p580 = pneg %p96
        %p581 = pneg %p93
        %p582 = pneg %p117
        %p583 = pneg %p114
        %p584 = pneg %p138
        %p585 = pneg %p135
        %p586 = pneg %p159
        %p587 = pneg %p156
        %p588 = pneg %p180
        %p589 = pneg %p177
        %p590 = pneg %p201
        %p591 = pneg %p198
        %p592 = pneg %p222
        %p593 = pneg %p219
        %p594 = pneg %p243
        %p595 = pneg %p240
        %p596 = pneg %p264
        %p597 = pneg %p261
        %p598 = pneg %p285
        %p599 = pneg %p282
        %p600 = pneg %p306
        %p601 = pneg %p303
        %p602 = pneg %p327
        %p603 = pneg %p324
        %p604 = pneg %p348
        %p605 = pneg %p345
        %p606 = pneg %p369
        %p607 = pneg %p366
        %p608 = pneg %p397
        %p609 = pneg %p394
        %s610 = sand.u32 %s384, 1
        %s611 = scalar_lea.sflag [#allocation6], %s610
        %s612 = sand.u32 %s384, 1
        %s613 = smul.addr %s612, 8
        %s614 = scalar_lea.vmem [#allocation15], %s613
        %p615 = scmp.lt.s32.totalorder %s39, 1
        %s616 = scalar_select %p615, %s39, 1
        %s617 = smul.addr %s616, 2
        %s618 = smul.addr %s617, 8
        %s619 = scalar_lea.vmem %s1, %s618
        %p620 = scmp.eq.s32.totalorder %s40, 0
        // Predicated region
        $region105: #{tpu_custom_call.1} parent=79 // pred_check
          %p621 = pneg %p620
        $region106: #{tpu_custom_call.1} parent=79 // pred_check_branch
          %623 = sbr.rel (%p621) target = $region108
        $region107: #{tpu_custom_call.1} parent=79 // pred_region
          %v624 = vld [vmem:[%s619] sm:$0xff]
          %v625 = vld [vmem:[%s619 + $0x8] sm:$0xff]
          %v626 = vld [vmem:[#allocation7] sm:$0xff]
          %v627 = vld [vmem:[#allocation7 + $0x8] sm:$0xff]
          %v628 = vld [vmem:[#allocation7 + $0x10] sm:$0xff]
          %v629 = vld [vmem:[#allocation7 + $0x18] sm:$0xff]
          %v630 = vld [vmem:[%s3] sm:$0xff]
          %v631 = vld [vmem:[%s3 + $0x8] sm:$0xff]
          %v632 = vld [vmem:[%s3 + $0x10] sm:$0xff]
          %v633 = vld [vmem:[%s3 + $0x18] sm:$0xff]
          %635 = vset.pattern.permute.xlu0 0
          %636 = vperm.xlu0 %635, %v630
          %v637 = vpop.permute.xlu0 %636
          %640 = vset.pattern.permute.xlu0 0
          %641 = vperm.xlu0 %640, %v631
          %v642 = vpop.permute.xlu0 %641
          %645 = vset.pattern.permute.xlu0 0
          %646 = vperm.xlu0 %645, %v632
          %v647 = vpop.permute.xlu0 %646
          %650 = vset.pattern.permute.xlu0 0
          %651 = vperm.xlu0 %650, %v633
          %v652 = vpop.permute.xlu0 %651
          %vm654 = vcmask 523264
          %v656 = vsel %vm654, %v626, 0
          %v659 = vsel %vm654, %v627, 0
          %v662 = vsel %vm654, %v628, 0
          %v665 = vsel %vm654, %v629, 0
          %v668 = vsel %vm654, %v624, 0
          %v671 = vsel %vm654, %v625, 0
          %673 = vmatprep.subr.mxu0 0.0
          %674 = vmatpush1.xpose.msra.mxu0 0.0
          %675 = vmatprep.subr.mxu0 0.0
          %676 = vmatpush1.xpose.msra.mxu0 0.0
          %677 = vmatprep.subr.mxu0 0.0
          %678 = vmatpush1.xpose.msra.mxu0 0.0
          %679 = vmatprep.subr.mxu0 0.0
          %680 = vmatpush1.xpose.msra.mxu0 0.0
          %681 = vmatprep.subr.mxu0 0.0
          %682 = vmatpush1.xpose.msra.mxu0 0.0
          %683 = vmatprep.subr.mxu0 0.0
          %684 = vmatpush1.xpose.msra.mxu0 0.0
          %685 = vmatprep.subr.mxu0 0.0
          %686 = vmatpush1.xpose.msra.mxu0 0.0
          %687 = vmatprep.subr.mxu0 0.0
          %688 = vmatpush1.xpose.msra.mxu0 0.0
          %689 = vmatprep.subr.mxu0 0.0
          %690 = vmatpush1.xpose.msra.mxu0 0.0
          %691 = vmatprep.subr.mxu0 0.0
          %692 = vmatpush1.xpose.msra.mxu0 0.0
          %693 = vmatprep.subr.mxu0 0.0
          %694 = vmatpush1.xpose.msra.mxu0 0.0
          %695 = vmatprep.subr.mxu0 0.0
          %696 = vmatpush1.xpose.msra.mxu0 0.0
          %697 = vmatprep.subr.mxu0 0.0
          %698 = vmatpush1.xpose.msra.mxu0 0.0
          %699 = vmatprep.subr.mxu0 0.0
          %700 = vmatpush1.xpose.msra.mxu0 0.0
          %701 = vmatprep.subr.mxu0 0.0
          %702 = vmatpush1.xpose.msra.mxu0 %v671
          %703 = vmatprep.subr.mxu0 0.0
          %704 = vmatpush1.xpose.msra.mxu0 %v668
          %705 = vmatprep.subr.mxu0 0.0
          %706 = vmatpush2.xpose.msra.mxu0 0.0
          %707 = vmatprep.subr.mxu0 0.0
          %708 = vmatpush2.xpose.msra.mxu0 0.0
          %709 = vmatprep.subr.mxu0 0.0
          %710 = vmatpush2.xpose.msra.mxu0 0.0
          %711 = vmatprep.subr.mxu0 0.0
          %712 = vmatpush2.xpose.msra.mxu0 0.0
          %713 = vmatprep.subr.mxu0 0.0
          %714 = vmatpush2.xpose.msra.mxu0 0.0
          %715 = vmatprep.subr.mxu0 0.0
          %716 = vmatpush2.xpose.msra.mxu0 0.0
          %717 = vmatprep.subr.mxu0 0.0
          %718 = vmatpush2.xpose.msra.mxu0 0.0
          %719 = vmatprep.subr.mxu0 0.0
          %720 = vmatpush2.xpose.msra.mxu0 0.0
          %721 = vmatprep.subr.mxu0 0.0
          %722 = vmatpush2.xpose.msra.mxu0 0.0
          %723 = vmatprep.subr.mxu0 0.0
          %724 = vmatpush2.xpose.msra.mxu0 0.0
          %725 = vmatprep.subr.mxu0 0.0
          %726 = vmatpush2.xpose.msra.mxu0 0.0
          %727 = vmatprep.subr.mxu0 0.0
          %728 = vmatpush2.xpose.msra.mxu0 0.0
          %729 = vmatprep.subr.mxu0 0.0
          %730 = vmatpush2.xpose.msra.mxu0 0.0
          %731 = vmatprep.subr.mxu0 0.0
          %732 = vmatpush2.xpose.msra.mxu0 0.0
          %733 = vmatprep.subr.mxu0 0.0
          %734 = vmatpush2.xpose.msra.mxu0 0.0
          %735 = vmatprep.subr.mxu0 0.0
          %736 = vmatpush2.xpose.msra.mxu0 0.0
          %737 = vmatprep.mubr.f32.mxu0 0.0
          %738 = vmatmul.mubr.f32.gmra.mxu0 %v656
          %v739 = vpop.f32.mrf.mxu0
          %v740 = vadd.f32 %v637, %v739
          %v741 = vpop.f32.mrf.mxu0
          %742 = vmatprep.mubr.f32.mxu0 0.0
          %743 = vmatmul.mubr.f32.gmra.mxu0 %v659
          %v744 = vpop.f32.mrf.mxu0
          %v745 = vadd.f32 %v642, %v744
          %v746 = vpop.f32.mrf.mxu0
          %747 = vmatprep.mubr.f32.mxu0 0.0
          %748 = vmatmul.mubr.f32.gmra.mxu0 %v662
          %v749 = vpop.f32.mrf.mxu0
          %v750 = vadd.f32 %v647, %v749
          %v751 = vpop.f32.mrf.mxu0
          %752 = vmatprep.mubr.f32.mxu0 0.0
          %753 = vmatmul.mubr.f32.gmra.mxu0 %v665
          %v754 = vpop.f32.mrf.mxu0
          %v755 = vadd.f32 %v652, %v754
          %v756 = vpop.f32.mrf.mxu0
          %757 = vdwg.mxu0
          %vm758 = vcmask 130048
          %759 = vst.msk [vmem:[#allocation2] sm:$0xff] %vm758, %v740
          %760 = vst.msk [vmem:[#allocation2 + $0x8] sm:$0xff] %vm758, %v745
          %761 = vst.msk [vmem:[#allocation2 + $0x10] sm:$0xff] %vm758, %v750
          %762 = vst.msk [vmem:[#allocation2 + $0x18] sm:$0xff] %vm758, %v755
          %v763 = vld [vmem:[#allocation9] sm:$0xff]
          %v764 = vld [vmem:[#allocation9 + $0x8] sm:$0xff]
          %v765 = vld [vmem:[#allocation9 + $0x10] sm:$0xff]
          %v766 = vld [vmem:[#allocation9 + $0x18] sm:$0xff]
          %v767 = vld [vmem:[#allocation9 + $0x20] sm:$0xff]
          %v768 = vld [vmem:[#allocation9 + $0x28] sm:$0xff]
          %v769 = vld [vmem:[#allocation9 + $0x30] sm:$0xff]
          %v770 = vld [vmem:[#allocation9 + $0x38] sm:$0xff]
          %v771 = vld [vmem:[%s5] sm:$0x1]
          %v773 = vlaneseq
          %v774 = vshrl.u32 %v773, 7
          %v775 = vsub.s32 0, %v774
          %v776 = vrot.slane %v771, %v775
          %778 = vmatprep.subr.mxu0 0.0
          %779 = vmatpush1.msra.mxu0 0.0
          %780 = vmatprep.subr.mxu0 0.0
          %781 = vmatpush1.msra.mxu0 0.0
          %782 = vmatprep.subr.mxu0 0.0
          %783 = vmatpush1.msra.mxu0 0.0
          %784 = vmatprep.subr.mxu0 0.0
          %785 = vmatpush1.msra.mxu0 0.0
          %786 = vmatprep.subr.mxu0 0.0
          %787 = vmatpush1.msra.mxu0 0.0
          %788 = vmatprep.subr.mxu0 0.0
          %789 = vmatpush1.msra.mxu0 0.0
          %790 = vmatprep.subr.mxu0 0.0
          %791 = vmatpush1.msra.mxu0 0.0
          %792 = vmatprep.subr.mxu0 0.0
          %793 = vmatpush1.msra.mxu0 0.0
          %794 = vmatprep.subr.mxu0 0.0
          %795 = vmatpush1.msra.mxu0 %v770
          %796 = vmatprep.subr.mxu0 0.0
          %797 = vmatpush1.msra.mxu0 %v769
          %798 = vmatprep.subr.mxu0 0.0
          %799 = vmatpush1.msra.mxu0 %v768
          %800 = vmatprep.subr.mxu0 0.0
          %801 = vmatpush1.msra.mxu0 %v767
          %802 = vmatprep.subr.mxu0 0.0
          %803 = vmatpush1.msra.mxu0 %v766
          %804 = vmatprep.subr.mxu0 0.0
          %805 = vmatpush1.msra.mxu0 %v765
          %806 = vmatprep.subr.mxu0 0.0
          %807 = vmatpush1.msra.mxu0 %v764
          %808 = vmatprep.subr.mxu0 0.0
          %809 = vmatpush1.msra.mxu0 %v763
          %810 = vmatprep.subr.mxu0 0.0
          %811 = vmatpush2.msra.mxu0 0.0
          %812 = vmatprep.subr.mxu0 0.0
          %813 = vmatpush2.msra.mxu0 0.0
          %814 = vmatprep.subr.mxu0 0.0
          %815 = vmatpush2.msra.mxu0 0.0
          %816 = vmatprep.subr.mxu0 0.0
          %817 = vmatpush2.msra.mxu0 0.0
          %818 = vmatprep.subr.mxu0 0.0
          %819 = vmatpush2.msra.mxu0 0.0
          %820 = vmatprep.subr.mxu0 0.0
          %821 = vmatpush2.msra.mxu0 0.0
          %822 = vmatprep.subr.mxu0 0.0
          %823 = vmatpush2.msra.mxu0 0.0
          %824 = vmatprep.subr.mxu0 0.0
          %825 = vmatpush2.msra.mxu0 0.0
          %826 = vmatprep.subr.mxu0 0.0
          %827 = vmatpush2.msra.mxu0 0.0
          %828 = vmatprep.subr.mxu0 0.0
          %829 = vmatpush2.msra.mxu0 0.0
          %830 = vmatprep.subr.mxu0 0.0
          %831 = vmatpush2.msra.mxu0 0.0
          %832 = vmatprep.subr.mxu0 0.0
          %833 = vmatpush2.msra.mxu0 0.0
          %834 = vmatprep.subr.mxu0 0.0
          %835 = vmatpush2.msra.mxu0 0.0
          %836 = vmatprep.subr.mxu0 0.0
          %837 = vmatpush2.msra.mxu0 0.0
          %838 = vmatprep.subr.mxu0 0.0
          %839 = vmatpush2.msra.mxu0 0.0
          %840 = vmatprep.subr.mxu0 0.0
          %841 = vmatpush2.msra.mxu0 0.0
          %842 = vmatprep.mubr.f32.mxu0 0.0
          %843 = vmatmul.mubr.f32.gmra.mxu0 %v668
          %v844 = vpop.f32.mrf.mxu0
          %v845 = vadd.f32 %v776, %v844
          %v846 = vpop.f32.mrf.mxu0
          %847 = vmatprep.mubr.f32.mxu0 0.0
          %848 = vmatmul.mubr.f32.gmra.mxu0 %v671
          %v849 = vpop.f32.mrf.mxu0
          %v850 = vadd.f32 %v776, %v849
          %v851 = vpop.f32.mrf.mxu0
          %852 = vdwg.mxu0
          %vm853 = vcmask 261120
          %854 = vst.msk [vmem:[#allocation3] sm:$0xff] %vm853, %v845
          %855 = vst.msk [vmem:[#allocation3 + $0x8] sm:$0xff] %vm853, %v850
          %858 = vrot.lane.b32.xlu0 %v845, 96
          %v859 = vpop.permute.xlu0 %858
          %860 = vrot.lane.b32.xlu0 %v850, 96
          %v861 = vpop.permute.xlu0 %860
          %s864 = scalar_lea.vmem [#allocation3], 16
          %865 = vst.msk [vmem:[%s864] sm:$0xff] %vm853, %v859
          %866 = vst.msk [vmem:[%s864 + $0x8] sm:$0xff] %vm853, %v861
          %867 = vrot.lane.b32.xlu0 %v845, 64
          %v868 = vpop.permute.xlu0 %867
          %869 = vrot.lane.b32.xlu0 %v850, 64
          %v870 = vpop.permute.xlu0 %869
          %s873 = scalar_lea.vmem [#allocation3], 32
          %874 = vst.msk [vmem:[%s873] sm:$0xff] %vm853, %v868
          %875 = vst.msk [vmem:[%s873 + $0x8] sm:$0xff] %vm853, %v870
          %876 = vrot.lane.b32.xlu0 %v845, 32
          %v877 = vpop.permute.xlu0 %876
          %878 = vrot.lane.b32.xlu0 %v850, 32
          %v879 = vpop.permute.xlu0 %878
          %s882 = scalar_lea.vmem [#allocation3], 48
          %883 = vst.msk [vmem:[%s882] sm:$0xff] %vm853, %v877
          %884 = vst.msk [vmem:[%s882 + $0x8] sm:$0xff] %vm853, %v879
        $region108: #{tpu_custom_call.1} parent=79 // pred_fallthru
          _
        %v885 = vld [vmem:[%s543] sm:$0xff]
        %v886 = vld [vmem:[#allocation10] sm:$0xff]
        %v887 = vld [vmem:[#allocation10 + $0x8] sm:$0xff]
        %v888 = vld [vmem:[#allocation10 + $0x10] sm:$0xff]
        %v889 = vld [vmem:[#allocation10 + $0x18] sm:$0xff]
        %v890 = vld [vmem:[#allocation10 + $0x20] sm:$0xff]
        %v891 = vld [vmem:[#allocation10 + $0x28] sm:$0xff]
        %v892 = vld [vmem:[#allocation10 + $0x30] sm:$0xff]
        %v893 = vld [vmem:[#allocation10 + $0x38] sm:$0xff]
        %vm894 = vcmask 261120
        %v896 = vsel %vm894, %v885, 0
        %898 = vmatprep.subr.mxu0 0.0
        %899 = vmatpush1.msra.mxu0 0.0
        %900 = vmatprep.subr.mxu0 0.0
        %901 = vmatpush1.msra.mxu0 0.0
        %902 = vmatprep.subr.mxu0 0.0
        %903 = vmatpush1.msra.mxu0 0.0
        %904 = vmatprep.subr.mxu0 0.0
        %905 = vmatpush1.msra.mxu0 0.0
        %906 = vmatprep.subr.mxu0 0.0
        %907 = vmatpush1.msra.mxu0 0.0
        %908 = vmatprep.subr.mxu0 0.0
        %909 = vmatpush1.msra.mxu0 0.0
        %910 = vmatprep.subr.mxu0 0.0
        %911 = vmatpush1.msra.mxu0 0.0
        %912 = vmatprep.subr.mxu0 0.0
        %913 = vmatpush1.msra.mxu0 0.0
        %914 = vmatprep.subr.mxu0 0.0
        %915 = vmatpush1.msra.mxu0 0.0
        %916 = vmatprep.subr.mxu0 0.0
        %917 = vmatpush1.msra.mxu0 0.0
        %918 = vmatprep.subr.mxu0 0.0
        %919 = vmatpush1.msra.mxu0 0.0
        %920 = vmatprep.subr.mxu0 0.0
        %921 = vmatpush1.msra.mxu0 0.0
        %922 = vmatprep.subr.mxu0 %v893
        %923 = vmatpush1.msra.mxu0 %v892
        %924 = vmatprep.subr.mxu0 %v891
        %925 = vmatpush1.msra.mxu0 %v890
        %926 = vmatprep.subr.mxu0 %v889
        %927 = vmatpush1.msra.mxu0 %v888
        %928 = vmatprep.subr.mxu0 %v887
        %929 = vmatpush1.msra.mxu0 %v886
        %930 = vmatprep.subr.mxu0 0.0
        %931 = vmatpush2.msra.mxu0 0.0
        %932 = vmatprep.subr.mxu0 0.0
        %933 = vmatpush2.msra.mxu0 0.0
        %934 = vmatprep.subr.mxu0 0.0
        %935 = vmatpush2.msra.mxu0 0.0
        %936 = vmatprep.subr.mxu0 0.0
        %937 = vmatpush2.msra.mxu0 0.0
        %938 = vmatprep.subr.mxu0 0.0
        %939 = vmatpush2.msra.mxu0 0.0
        %940 = vmatprep.subr.mxu0 0.0
        %941 = vmatpush2.msra.mxu0 0.0
        %942 = vmatprep.subr.mxu0 0.0
        %943 = vmatpush2.msra.mxu0 0.0
        %944 = vmatprep.subr.mxu0 0.0
        %945 = vmatpush2.msra.mxu0 0.0
        %946 = vmatprep.subr.mxu0 0.0
        %947 = vmatpush2.msra.mxu0 0.0
        %948 = vmatprep.subr.mxu0 0.0
        %949 = vmatpush2.msra.mxu0 0.0
        %950 = vmatprep.subr.mxu0 0.0
        %951 = vmatpush2.msra.mxu0 0.0
        %952 = vmatprep.subr.mxu0 0.0
        %953 = vmatpush2.msra.mxu0 0.0
        %954 = vmatprep.subr.mxu0 0.0
        %955 = vmatpush2.msra.mxu0 0.0
        %956 = vmatprep.subr.mxu0 0.0
        %957 = vmatpush2.msra.mxu0 0.0
        %958 = vmatprep.subr.mxu0 0.0
        %959 = vmatpush2.msra.mxu0 0.0
        %960 = vmatprep.subr.mxu0 0.0
        %961 = vmatpush2.msra.mxu0 0.0
        %962 = vmatprep.mubr.f32.mxu0 0.0
        %963 = vmatmul.mubr.f32.gmra.mxu0 %v896
        %v964 = vpop.f32.mrf.mxu0
        %v965 = vadd.f32 0.0, %v964
        %v966 = vpop.f32.mrf.mxu0
        %v967 = vadd.f32 0.0, %v966
        %968 = vdwg.mxu0
        %v969 = vld [vmem:[#allocation2] sm:$0xff]
        %vm970 = vcmask 64512
        %v972 = vsel %vm970, %v965, 0
        %974 = vmatprep.subr.mxu0 0.0
        %975 = vmatpush1.msra.mxu0 0.0
        %976 = vmatprep.subr.mxu0 0.0
        %977 = vmatpush1.msra.mxu0 0.0
        %978 = vmatprep.subr.mxu0 0.0
        %979 = vmatpush1.msra.mxu0 0.0
        %980 = vmatprep.subr.mxu0 0.0
        %981 = vmatpush1.msra.mxu0 0.0
        %982 = vmatprep.subr.mxu0 0.0
        %983 = vmatpush1.msra.mxu0 0.0
        %984 = vmatprep.subr.mxu0 0.0
        %985 = vmatpush1.msra.mxu0 0.0
        %986 = vmatprep.subr.mxu0 0.0
        %987 = vmatpush1.msra.mxu0 0.0
        %988 = vmatprep.subr.mxu0 0.0
        %989 = vmatpush1.msra.mxu0 0.0
        %990 = vmatprep.subr.mxu0 0.0
        %991 = vmatpush1.msra.mxu0 0.0
        %992 = vmatprep.subr.mxu0 0.0
        %993 = vmatpush1.msra.mxu0 0.0
        %994 = vmatprep.subr.mxu0 0.0
        %995 = vmatpush1.msra.mxu0 0.0
        %996 = vmatprep.subr.mxu0 0.0
        %997 = vmatpush1.msra.mxu0 0.0
        %998 = vmatprep.subr.mxu0 0.0
        %999 = vmatpush1.msra.mxu0 0.0
        %1000 = vmatprep.subr.mxu0 0.0
        %1001 = vmatpush1.msra.mxu0 0.0
        %1002 = vmatprep.subr.mxu0 0.0
        %1003 = vmatpush1.msra.mxu0 0.0
        %1004 = vmatprep.subr.mxu0 0.0
        %1005 = vmatpush1.msra.mxu0 %v969
        %1006 = vmatprep.subr.mxu0 0.0
        %1007 = vmatpush2.msra.mxu0 0.0
        %1008 = vmatprep.subr.mxu0 0.0
        %1009 = vmatpush2.msra.mxu0 0.0
        %1010 = vmatprep.subr.mxu0 0.0
        %1011 = vmatpush2.msra.mxu0 0.0
        %1012 = vmatprep.subr.mxu0 0.0
        %1013 = vmatpush2.msra.mxu0 0.0
        %1014 = vmatprep.subr.mxu0 0.0
        %1015 = vmatpush2.msra.mxu0 0.0
        %1016 = vmatprep.subr.mxu0 0.0
        %1017 = vmatpush2.msra.mxu0 0.0
        %1018 = vmatprep.subr.mxu0 0.0
        %1019 = vmatpush2.msra.mxu0 0.0
        %1020 = vmatprep.subr.mxu0 0.0
        %1021 = vmatpush2.msra.mxu0 0.0
        %1022 = vmatprep.subr.mxu0 0.0
        %1023 = vmatpush2.msra.mxu0 0.0
        %1024 = vmatprep.subr.mxu0 0.0
        %1025 = vmatpush2.msra.mxu0 0.0
        %1026 = vmatprep.subr.mxu0 0.0
        %1027 = vmatpush2.msra.mxu0 0.0
        %1028 = vmatprep.subr.mxu0 0.0
        %1029 = vmatpush2.msra.mxu0 0.0
        %1030 = vmatprep.subr.mxu0 0.0
        %1031 = vmatpush2.msra.mxu0 0.0
        %1032 = vmatprep.subr.mxu0 0.0
        %1033 = vmatpush2.msra.mxu0 0.0
        %1034 = vmatprep.subr.mxu0 0.0
        %1035 = vmatpush2.msra.mxu0 0.0
        %1036 = vmatprep.subr.mxu0 0.0
        %1037 = vmatpush2.msra.mxu0 0.0
        %1038 = vmatprep.mubr.f32.mxu0 0.0
        %1039 = vmatmul.mubr.f32.gmra.mxu0 %v972
        %v1040 = vpop.f32.mrf.mxu0
        %v1041 = vadd.f32 0.0, %v1040
        %v1042 = vpop.f32.mrf.mxu0
        %1043 = vdwg.mxu0
        %1044 = vrot.lane.b32.xlu0 %v965, 96
        %v1045 = vpop.permute.xlu0 %1044
        %v1047 = vmul.f32 %v965, %v1045
        %v1048 = vsel %vm970, %v1047, 0.0
        %1049 = vadd.xlane.f32.xlu0 %v1048
        %v1050 = vpop.xlane.xlu0 %1049
        %vm1051 = vcmask 130048
        %v1052 = vsel %vm1051, %v1041, -inf
        %1053 = vmax.xlane.f32.xlu0 %v1052
        %v1054 = vpop.xlane.xlu0 %1053
        %v1055 = vmax.f32 %v1054, %v1050
        %v1056 = vsub.f32 %v1041, %v1055
        %v1057 = vmul.f32 %v1056, 1.442695
        %v1058 = vpow.pop %v1057
        %v1059 = vsub.f32 %v1050, %v1055
        %v1060 = vmul.f32 %v1059, 1.442695
        %v1061 = vpow.pop %v1060
        %v1062 = vsel %vm1051, %v1058, 0.0
        %1063 = vadd.xlane.f32.xlu0 %v1062
        %v1064 = vpop.xlane.xlu0 %1063
        %v1065 = vadd.f32 %v1061, %v1064
        %v1066 = vrcp.pop %v1065
        %v1067 = vld [vmem:[#allocation3] sm:$0xff]
        %v1068 = vld [vmem:[#allocation3 + $0x8] sm:$0xff]
        %v1069 = vmul.f32 %v1061, %v965
        %1071 = vrot.lane.b32.xlu0 %v1069, 64
        %v1072 = vpop.permute.xlu0 %1071
        %v1075 = vsel %vm1051, %v1058, 0
        %1077 = vmatprep.subr.mxu0 0.0
        %1078 = vmatpush1.msra.mxu0 0.0
        %1079 = vmatprep.subr.mxu0 0.0
        %1080 = vmatpush1.msra.mxu0 0.0
        %1081 = vmatprep.subr.mxu0 0.0
        %1082 = vmatpush1.msra.mxu0 0.0
        %1083 = vmatprep.subr.mxu0 0.0
        %1084 = vmatpush1.msra.mxu0 0.0
        %1085 = vmatprep.subr.mxu0 0.0
        %1086 = vmatpush1.msra.mxu0 0.0
        %1087 = vmatprep.subr.mxu0 0.0
        %1088 = vmatpush1.msra.mxu0 0.0
        %1089 = vmatprep.subr.mxu0 0.0
        %1090 = vmatpush1.msra.mxu0 0.0
        %1091 = vmatprep.subr.mxu0 0.0
        %1092 = vmatpush1.msra.mxu0 0.0
        %1093 = vmatprep.subr.mxu0 0.0
        %1094 = vmatpush1.msra.mxu0 0.0
        %1095 = vmatprep.subr.mxu0 0.0
        %1096 = vmatpush1.msra.mxu0 0.0
        %1097 = vmatprep.subr.mxu0 0.0
        %1098 = vmatpush1.msra.mxu0 0.0
        %1099 = vmatprep.subr.mxu0 0.0
        %1100 = vmatpush1.msra.mxu0 0.0
        %1101 = vmatprep.subr.mxu0 0.0
        %1102 = vmatpush1.msra.mxu0 0.0
        %1103 = vmatprep.subr.mxu0 0.0
        %1104 = vmatpush1.msra.mxu0 0.0
        %1105 = vmatprep.subr.mxu0 0.0
        %1106 = vmatpush1.msra.mxu0 %v1068
        %1107 = vmatprep.subr.mxu0 0.0
        %1108 = vmatpush1.msra.mxu0 %v1067
        %1109 = vmatprep.subr.mxu0 0.0
        %1110 = vmatpush2.msra.mxu0 0.0
        %1111 = vmatprep.subr.mxu0 0.0
        %1112 = vmatpush2.msra.mxu0 0.0
        %1113 = vmatprep.subr.mxu0 0.0
        %1114 = vmatpush2.msra.mxu0 0.0
        %1115 = vmatprep.subr.mxu0 0.0
        %1116 = vmatpush2.msra.mxu0 0.0
        %1117 = vmatprep.subr.mxu0 0.0
        %1118 = vmatpush2.msra.mxu0 0.0
        %1119 = vmatprep.subr.mxu0 0.0
        %1120 = vmatpush2.msra.mxu0 0.0
        %1121 = vmatprep.subr.mxu0 0.0
        %1122 = vmatpush2.msra.mxu0 0.0
        %1123 = vmatprep.subr.mxu0 0.0
        %1124 = vmatpush2.msra.mxu0 0.0
        %1125 = vmatprep.subr.mxu0 0.0
        %1126 = vmatpush2.msra.mxu0 0.0
        %1127 = vmatprep.subr.mxu0 0.0
        %1128 = vmatpush2.msra.mxu0 0.0
        %1129 = vmatprep.subr.mxu0 0.0
        %1130 = vmatpush2.msra.mxu0 0.0
        %1131 = vmatprep.subr.mxu0 0.0
        %1132 = vmatpush2.msra.mxu0 0.0
        %1133 = vmatprep.subr.mxu0 0.0
        %1134 = vmatpush2.msra.mxu0 0.0
        %1135 = vmatprep.subr.mxu0 0.0
        %1136 = vmatpush2.msra.mxu0 0.0
        %1137 = vmatprep.subr.mxu0 0.0
        %1138 = vmatpush2.msra.mxu0 0.0
        %1139 = vmatprep.subr.mxu0 0.0
        %1140 = vmatpush2.msra.mxu0 0.0
        %1141 = vmatprep.mubr.f32.mxu0 0.0
        %1142 = vmatmul.mubr.f32.gmra.mxu0 %v1075
        %v1143 = vpop.f32.mrf.mxu0
        %v1144 = vadd.f32 %v1072, %v1143
        %v1145 = vpop.f32.mrf.mxu0
        %1146 = vdwg.mxu0
        %v1147 = vmul.f32 %v1144, %v1066
        %v1148 = vadd.f32 %v1147, 0.0
        %v1149 = vld [vmem:[#allocation2 + $0x8] sm:$0xff]
        %1150 = vrot.lane.b32.xlu0 %v965, 120
        %v1151 = vpop.permute.xlu0 %1150
        %v1152 = vsel %vm970, %v1151, 0
        %1154 = vmatprep.subr.mxu0 0.0
        %1155 = vmatpush1.msra.mxu0 0.0
        %1156 = vmatprep.subr.mxu0 0.0
        %1157 = vmatpush1.msra.mxu0 0.0
        %1158 = vmatprep.subr.mxu0 0.0
        %1159 = vmatpush1.msra.mxu0 0.0
        %1160 = vmatprep.subr.mxu0 0.0
        %1161 = vmatpush1.msra.mxu0 0.0
        %1162 = vmatprep.subr.mxu0 0.0
        %1163 = vmatpush1.msra.mxu0 0.0
        %1164 = vmatprep.subr.mxu0 0.0
        %1165 = vmatpush1.msra.mxu0 0.0
        %1166 = vmatprep.subr.mxu0 0.0
        %1167 = vmatpush1.msra.mxu0 0.0
        %1168 = vmatprep.subr.mxu0 0.0
        %1169 = vmatpush1.msra.mxu0 0.0
        %1170 = vmatprep.subr.mxu0 0.0
        %1171 = vmatpush1.msra.mxu0 0.0
        %1172 = vmatprep.subr.mxu0 0.0
        %1173 = vmatpush1.msra.mxu0 0.0
        %1174 = vmatprep.subr.mxu0 0.0
        %1175 = vmatpush1.msra.mxu0 0.0
        %1176 = vmatprep.subr.mxu0 0.0
        %1177 = vmatpush1.msra.mxu0 0.0
        %1178 = vmatprep.subr.mxu0 0.0
        %1179 = vmatpush1.msra.mxu0 0.0
        %1180 = vmatprep.subr.mxu0 0.0
        %1181 = vmatpush1.msra.mxu0 0.0
        %1182 = vmatprep.subr.mxu0 0.0
        %1183 = vmatpush1.msra.mxu0 0.0
        %1184 = vmatprep.subr.mxu0 0.0
        %1185 = vmatpush1.msra.mxu0 %v1149
        %1186 = vmatprep.subr.mxu0 0.0
        %1187 = vmatpush2.msra.mxu0 0.0
        %1188 = vmatprep.subr.mxu0 0.0
        %1189 = vmatpush2.msra.mxu0 0.0
        %1190 = vmatprep.subr.mxu0 0.0
        %1191 = vmatpush2.msra.mxu0 0.0
        %1192 = vmatprep.subr.mxu0 0.0
        %1193 = vmatpush2.msra.mxu0 0.0
        %1194 = vmatprep.subr.mxu0 0.0
        %1195 = vmatpush2.msra.mxu0 0.0
        %1196 = vmatprep.subr.mxu0 0.0
        %1197 = vmatpush2.msra.mxu0 0.0
        %1198 = vmatprep.subr.mxu0 0.0
        %1199 = vmatpush2.msra.mxu0 0.0
        %1200 = vmatprep.subr.mxu0 0.0
        %1201 = vmatpush2.msra.mxu0 0.0
        %1202 = vmatprep.subr.mxu0 0.0
        %1203 = vmatpush2.msra.mxu0 0.0
        %1204 = vmatprep.subr.mxu0 0.0
        %1205 = vmatpush2.msra.mxu0 0.0
        %1206 = vmatprep.subr.mxu0 0.0
        %1207 = vmatpush2.msra.mxu0 0.0
        %1208 = vmatprep.subr.mxu0 0.0
        %1209 = vmatpush2.msra.mxu0 0.0
        %1210 = vmatprep.subr.mxu0 0.0
        %1211 = vmatpush2.msra.mxu0 0.0
        %1212 = vmatprep.subr.mxu0 0.0
        %1213 = vmatpush2.msra.mxu0 0.0
        %1214 = vmatprep.subr.mxu0 0.0
        %1215 = vmatpush2.msra.mxu0 0.0
        %1216 = vmatprep.subr.mxu0 0.0
        %1217 = vmatpush2.msra.mxu0 0.0
        %1218 = vmatprep.mubr.f32.mxu0 0.0
        %1219 = vmatmul.mubr.f32.gmra.mxu0 %v1152
        %v1220 = vpop.f32.mrf.mxu0
        %v1221 = vadd.f32 0.0, %v1220
        %v1222 = vpop.f32.mrf.mxu0
        %1223 = vdwg.mxu0
        %1225 = vrot.lane.b32.xlu0 %v1047, 120
        %v1226 = vpop.permute.xlu0 %1225
        %v1228 = vsel %vm970, %v1226, 0.0
        %1229 = vadd.xlane.f32.xlu0 %v1228
        %v1230 = vpop.xlane.xlu0 %1229
        %v1231 = vsel %vm1051, %v1221, -inf
        %1232 = vmax.xlane.f32.xlu0 %v1231
        %v1233 = vpop.xlane.xlu0 %1232
        %v1234 = vmax.f32 %v1233, %v1230
        %v1235 = vsub.f32 %v1221, %v1234
        %v1236 = vmul.f32 %v1235, 1.442695
        %v1237 = vpow.pop %v1236
        %v1238 = vsub.f32 %v1230, %v1234
        %v1239 = vmul.f32 %v1238, 1.442695
        %v1240 = vpow.pop %v1239
        %v1241 = vsel %vm1051, %v1237, 0.0
        %1242 = vadd.xlane.f32.xlu0 %v1241
        %v1243 = vpop.xlane.xlu0 %1242
        %v1244 = vadd.f32 %v1240, %v1243
        %v1245 = vrcp.pop %v1244
        %s1246 = scalar_lea.vmem [#allocation3], 16
        %v1247 = vld [vmem:[%s1246] sm:$0xff]
        %v1248 = vld [vmem:[%s1246 + $0x8] sm:$0xff]
        %v1249 = vmul.f32 %v1240, %v965
        %1251 = vrot.lane.b32.xlu0 %v1249, 32
        %v1252 = vpop.permute.xlu0 %1251
        %v1255 = vsel %vm1051, %v1237, 0
        %1257 = vmatprep.subr.mxu0 0.0
        %1258 = vmatpush1.msra.mxu0 0.0
        %1259 = vmatprep.subr.mxu0 0.0
        %1260 = vmatpush1.msra.mxu0 0.0
        %1261 = vmatprep.subr.mxu0 0.0
        %1262 = vmatpush1.msra.mxu0 0.0
        %1263 = vmatprep.subr.mxu0 0.0
        %1264 = vmatpush1.msra.mxu0 0.0
        %1265 = vmatprep.subr.mxu0 0.0
        %1266 = vmatpush1.msra.mxu0 0.0
        %1267 = vmatprep.subr.mxu0 0.0
        %1268 = vmatpush1.msra.mxu0 0.0
        %1269 = vmatprep.subr.mxu0 0.0
        %1270 = vmatpush1.msra.mxu0 0.0
        %1271 = vmatprep.subr.mxu0 0.0
        %1272 = vmatpush1.msra.mxu0 0.0
        %1273 = vmatprep.subr.mxu0 0.0
        %1274 = vmatpush1.msra.mxu0 0.0
        %1275 = vmatprep.subr.mxu0 0.0
        %1276 = vmatpush1.msra.mxu0 0.0
        %1277 = vmatprep.subr.mxu0 0.0
        %1278 = vmatpush1.msra.mxu0 0.0
        %1279 = vmatprep.subr.mxu0 0.0
        %1280 = vmatpush1.msra.mxu0 0.0
        %1281 = vmatprep.subr.mxu0 0.0
        %1282 = vmatpush1.msra.mxu0 0.0
        %1283 = vmatprep.subr.mxu0 0.0
        %1284 = vmatpush1.msra.mxu0 0.0
        %1285 = vmatprep.subr.mxu0 0.0
        %1286 = vmatpush1.msra.mxu0 %v1248
        %1287 = vmatprep.subr.mxu0 0.0
        %1288 = vmatpush1.msra.mxu0 %v1247
        %1289 = vmatprep.subr.mxu0 0.0
        %1290 = vmatpush2.msra.mxu0 0.0
        %1291 = vmatprep.subr.mxu0 0.0
        %1292 = vmatpush2.msra.mxu0 0.0
        %1293 = vmatprep.subr.mxu0 0.0
        %1294 = vmatpush2.msra.mxu0 0.0
        %1295 = vmatprep.subr.mxu0 0.0
        %1296 = vmatpush2.msra.mxu0 0.0
        %1297 = vmatprep.subr.mxu0 0.0
        %1298 = vmatpush2.msra.mxu0 0.0
        %1299 = vmatprep.subr.mxu0 0.0
        %1300 = vmatpush2.msra.mxu0 0.0
        %1301 = vmatprep.subr.mxu0 0.0
        %1302 = vmatpush2.msra.mxu0 0.0
        %1303 = vmatprep.subr.mxu0 0.0
        %1304 = vmatpush2.msra.mxu0 0.0
        %1305 = vmatprep.subr.mxu0 0.0
        %1306 = vmatpush2.msra.mxu0 0.0
        %1307 = vmatprep.subr.mxu0 0.0
        %1308 = vmatpush2.msra.mxu0 0.0
        %1309 = vmatprep.subr.mxu0 0.0
        %1310 = vmatpush2.msra.mxu0 0.0
        %1311 = vmatprep.subr.mxu0 0.0
        %1312 = vmatpush2.msra.mxu0 0.0
        %1313 = vmatprep.subr.mxu0 0.0
        %1314 = vmatpush2.msra.mxu0 0.0
        %1315 = vmatprep.subr.mxu0 0.0
        %1316 = vmatpush2.msra.mxu0 0.0
        %1317 = vmatprep.subr.mxu0 0.0
        %1318 = vmatpush2.msra.mxu0 0.0
        %1319 = vmatprep.subr.mxu0 0.0
        %1320 = vmatpush2.msra.mxu0 0.0
        %1321 = vmatprep.mubr.f32.mxu0 0.0
        %1322 = vmatmul.mubr.f32.gmra.mxu0 %v1255
        %v1323 = vpop.f32.mrf.mxu0
        %v1324 = vadd.f32 %v1252, %v1323
        %v1325 = vpop.f32.mrf.mxu0
        %1326 = vdwg.mxu0
        %v1327 = vmul.f32 %v1324, %v1245
        %v1328 = vadd.f32 %v1148, %v1327
        %v1329 = vld [vmem:[#allocation2 + $0x10] sm:$0xff]
        %1330 = vrot.lane.b32.xlu0 %v965, 112
        %v1331 = vpop.permute.xlu0 %1330
        %v1332 = vsel %vm970, %v1331, 0
        %1334 = vmatprep.subr.mxu0 0.0
        %1335 = vmatpush1.msra.mxu0 0.0
        %1336 = vmatprep.subr.mxu0 0.0
        %1337 = vmatpush1.msra.mxu0 0.0
        %1338 = vmatprep.subr.mxu0 0.0
        %1339 = vmatpush1.msra.mxu0 0.0
        %1340 = vmatprep.subr.mxu0 0.0
        %1341 = vmatpush1.msra.mxu0 0.0
        %1342 = vmatprep.subr.mxu0 0.0
        %1343 = vmatpush1.msra.mxu0 0.0
        %1344 = vmatprep.subr.mxu0 0.0
        %1345 = vmatpush1.msra.mxu0 0.0
        %1346 = vmatprep.subr.mxu0 0.0
        %1347 = vmatpush1.msra.mxu0 0.0
        %1348 = vmatprep.subr.mxu0 0.0
        %1349 = vmatpush1.msra.mxu0 0.0
        %1350 = vmatprep.subr.mxu0 0.0
        %1351 = vmatpush1.msra.mxu0 0.0
        %1352 = vmatprep.subr.mxu0 0.0
        %1353 = vmatpush1.msra.mxu0 0.0
        %1354 = vmatprep.subr.mxu0 0.0
        %1355 = vmatpush1.msra.mxu0 0.0
        %1356 = vmatprep.subr.mxu0 0.0
        %1357 = vmatpush1.msra.mxu0 0.0
        %1358 = vmatprep.subr.mxu0 0.0
        %1359 = vmatpush1.msra.mxu0 0.0
        %1360 = vmatprep.subr.mxu0 0.0
        %1361 = vmatpush1.msra.mxu0 0.0
        %1362 = vmatprep.subr.mxu0 0.0
        %1363 = vmatpush1.msra.mxu0 0.0
        %1364 = vmatprep.subr.mxu0 0.0
        %1365 = vmatpush1.msra.mxu0 %v1329
        %1366 = vmatprep.subr.mxu0 0.0
        %1367 = vmatpush2.msra.mxu0 0.0
        %1368 = vmatprep.subr.mxu0 0.0
        %1369 = vmatpush2.msra.mxu0 0.0
        %1370 = vmatprep.subr.mxu0 0.0
        %1371 = vmatpush2.msra.mxu0 0.0
        %1372 = vmatprep.subr.mxu0 0.0
        %1373 = vmatpush2.msra.mxu0 0.0
        %1374 = vmatprep.subr.mxu0 0.0
        %1375 = vmatpush2.msra.mxu0 0.0
        %1376 = vmatprep.subr.mxu0 0.0
        %1377 = vmatpush2.msra.mxu0 0.0
        %1378 = vmatprep.subr.mxu0 0.0
        %1379 = vmatpush2.msra.mxu0 0.0
        %1380 = vmatprep.subr.mxu0 0.0
        %1381 = vmatpush2.msra.mxu0 0.0
        %1382 = vmatprep.subr.mxu0 0.0
        %1383 = vmatpush2.msra.mxu0 0.0
        %1384 = vmatprep.subr.mxu0 0.0
        %1385 = vmatpush2.msra.mxu0 0.0
        %1386 = vmatprep.subr.mxu0 0.0
        %1387 = vmatpush2.msra.mxu0 0.0
        %1388 = vmatprep.subr.mxu0 0.0
        %1389 = vmatpush2.msra.mxu0 0.0
        %1390 = vmatprep.subr.mxu0 0.0
        %1391 = vmatpush2.msra.mxu0 0.0
        %1392 = vmatprep.subr.mxu0 0.0
        %1393 = vmatpush2.msra.mxu0 0.0
        %1394 = vmatprep.subr.mxu0 0.0
        %1395 = vmatpush2.msra.mxu0 0.0
        %1396 = vmatprep.subr.mxu0 0.0
        %1397 = vmatpush2.msra.mxu0 0.0
        %1398 = vmatprep.mubr.f32.mxu0 0.0
        %1399 = vmatmul.mubr.f32.gmra.mxu0 %v1332
        %v1400 = vpop.f32.mrf.mxu0
        %v1401 = vadd.f32 0.0, %v1400
        %v1402 = vpop.f32.mrf.mxu0
        %1403 = vdwg.mxu0
        %1404 = vrot.lane.b32.xlu0 %v1047, 112
        %v1405 = vpop.permute.xlu0 %1404
        %v1407 = vsel %vm970, %v1405, 0.0
        %1408 = vadd.xlane.f32.xlu0 %v1407
        %v1409 = vpop.xlane.xlu0 %1408
        %v1410 = vsel %vm1051, %v1401, -inf
        %1411 = vmax.xlane.f32.xlu0 %v1410
        %v1412 = vpop.xlane.xlu0 %1411
        %v1413 = vmax.f32 %v1412, %v1409
        %v1414 = vsub.f32 %v1401, %v1413
        %v1415 = vmul.f32 %v1414, 1.442695
        %v1416 = vpow.pop %v1415
        %v1417 = vsub.f32 %v1409, %v1413
        %v1418 = vmul.f32 %v1417, 1.442695
        %v1419 = vpow.pop %v1418
        %v1420 = vsel %vm1051, %v1416, 0.0
        %1421 = vadd.xlane.f32.xlu0 %v1420
        %v1422 = vpop.xlane.xlu0 %1421
        %v1423 = vadd.f32 %v1419, %v1422
        %v1424 = vrcp.pop %v1423
        %s1425 = scalar_lea.vmem [#allocation3], 32
        %v1426 = vld [vmem:[%s1425] sm:$0xff]
        %v1427 = vld [vmem:[%s1425 + $0x8] sm:$0xff]
        %v1428 = vmul.f32 %v1419, %v967
        %v1430 = vsel %vm1051, %v1416, 0
        %1432 = vmatprep.subr.mxu0 0.0
        %1433 = vmatpush1.msra.mxu0 0.0
        %1434 = vmatprep.subr.mxu0 0.0
        %1435 = vmatpush1.msra.mxu0 0.0
        %1436 = vmatprep.subr.mxu0 0.0
        %1437 = vmatpush1.msra.mxu0 0.0
        %1438 = vmatprep.subr.mxu0 0.0
        %1439 = vmatpush1.msra.mxu0 0.0
        %1440 = vmatprep.subr.mxu0 0.0
        %1441 = vmatpush1.msra.mxu0 0.0
        %1442 = vmatprep.subr.mxu0 0.0
        %1443 = vmatpush1.msra.mxu0 0.0
        %1444 = vmatprep.subr.mxu0 0.0
        %1445 = vmatpush1.msra.mxu0 0.0
        %1446 = vmatprep.subr.mxu0 0.0
        %1447 = vmatpush1.msra.mxu0 0.0
        %1448 = vmatprep.subr.mxu0 0.0
        %1449 = vmatpush1.msra.mxu0 0.0
        %1450 = vmatprep.subr.mxu0 0.0
        %1451 = vmatpush1.msra.mxu0 0.0
        %1452 = vmatprep.subr.mxu0 0.0
        %1453 = vmatpush1.msra.mxu0 0.0
        %1454 = vmatprep.subr.mxu0 0.0
        %1455 = vmatpush1.msra.mxu0 0.0
        %1456 = vmatprep.subr.mxu0 0.0
        %1457 = vmatpush1.msra.mxu0 0.0
        %1458 = vmatprep.subr.mxu0 0.0
        %1459 = vmatpush1.msra.mxu0 0.0
        %1460 = vmatprep.subr.mxu0 0.0
        %1461 = vmatpush1.msra.mxu0 %v1427
        %1462 = vmatprep.subr.mxu0 0.0
        %1463 = vmatpush1.msra.mxu0 %v1426
        %1464 = vmatprep.subr.mxu0 0.0
        %1465 = vmatpush2.msra.mxu0 0.0
        %1466 = vmatprep.subr.mxu0 0.0
        %1467 = vmatpush2.msra.mxu0 0.0
        %1468 = vmatprep.subr.mxu0 0.0
        %1469 = vmatpush2.msra.mxu0 0.0
        %1470 = vmatprep.subr.mxu0 0.0
        %1471 = vmatpush2.msra.mxu0 0.0
        %1472 = vmatprep.subr.mxu0 0.0
        %1473 = vmatpush2.msra.mxu0 0.0
        %1474 = vmatprep.subr.mxu0 0.0
        %1475 = vmatpush2.msra.mxu0 0.0
        %1476 = vmatprep.subr.mxu0 0.0
        %1477 = vmatpush2.msra.mxu0 0.0
        %1478 = vmatprep.subr.mxu0 0.0
        %1479 = vmatpush2.msra.mxu0 0.0
        %1480 = vmatprep.subr.mxu0 0.0
        %1481 = vmatpush2.msra.mxu0 0.0
        %1482 = vmatprep.subr.mxu0 0.0
        %1483 = vmatpush2.msra.mxu0 0.0
        %1484 = vmatprep.subr.mxu0 0.0
        %1485 = vmatpush2.msra.mxu0 0.0
        %1486 = vmatprep.subr.mxu0 0.0
        %1487 = vmatpush2.msra.mxu0 0.0
        %1488 = vmatprep.subr.mxu0 0.0
        %1489 = vmatpush2.msra.mxu0 0.0
        %1490 = vmatprep.subr.mxu0 0.0
        %1491 = vmatpush2.msra.mxu0 0.0
        %1492 = vmatprep.subr.mxu0 0.0
        %1493 = vmatpush2.msra.mxu0 0.0
        %1494 = vmatprep.subr.mxu0 0.0
        %1495 = vmatpush2.msra.mxu0 0.0
        %1496 = vmatprep.mubr.f32.mxu0 0.0
        %1497 = vmatmul.mubr.f32.gmra.mxu0 %v1430
        %v1498 = vpop.f32.mrf.mxu0
        %v1499 = vadd.f32 %v1428, %v1498
        %v1500 = vpop.f32.mrf.mxu0
        %1501 = vdwg.mxu0
        %v1502 = vmul.f32 %v1499, %v1424
        %v1503 = vadd.f32 %v1328, %v1502
        %v1504 = vld [vmem:[#allocation2 + $0x18] sm:$0xff]
        %1505 = vrot.lane.b32.xlu0 %v965, 104
        %v1506 = vpop.permute.xlu0 %1505
        %v1507 = vsel %vm970, %v1506, 0
        %1509 = vmatprep.subr.mxu0 0.0
        %1510 = vmatpush1.msra.mxu0 0.0
        %1511 = vmatprep.subr.mxu0 0.0
        %1512 = vmatpush1.msra.mxu0 0.0
        %1513 = vmatprep.subr.mxu0 0.0
        %1514 = vmatpush1.msra.mxu0 0.0
        %1515 = vmatprep.subr.mxu0 0.0
        %1516 = vmatpush1.msra.mxu0 0.0
        %1517 = vmatprep.subr.mxu0 0.0
        %1518 = vmatpush1.msra.mxu0 0.0
        %1519 = vmatprep.subr.mxu0 0.0
        %1520 = vmatpush1.msra.mxu0 0.0
        %1521 = vmatprep.subr.mxu0 0.0
        %1522 = vmatpush1.msra.mxu0 0.0
        %1523 = vmatprep.subr.mxu0 0.0
        %1524 = vmatpush1.msra.mxu0 0.0
        %1525 = vmatprep.subr.mxu0 0.0
        %1526 = vmatpush1.msra.mxu0 0.0
        %1527 = vmatprep.subr.mxu0 0.0
        %1528 = vmatpush1.msra.mxu0 0.0
        %1529 = vmatprep.subr.mxu0 0.0
        %1530 = vmatpush1.msra.mxu0 0.0
        %1531 = vmatprep.subr.mxu0 0.0
        %1532 = vmatpush1.msra.mxu0 0.0
        %1533 = vmatprep.subr.mxu0 0.0
        %1534 = vmatpush1.msra.mxu0 0.0
        %1535 = vmatprep.subr.mxu0 0.0
        %1536 = vmatpush1.msra.mxu0 0.0
        %1537 = vmatprep.subr.mxu0 0.0
        %1538 = vmatpush1.msra.mxu0 0.0
        %1539 = vmatprep.subr.mxu0 0.0
        %1540 = vmatpush1.msra.mxu0 %v1504
        %1541 = vmatprep.subr.mxu0 0.0
        %1542 = vmatpush2.msra.mxu0 0.0
        %1543 = vmatprep.subr.mxu0 0.0
        %1544 = vmatpush2.msra.mxu0 0.0
        %1545 = vmatprep.subr.mxu0 0.0
        %1546 = vmatpush2.msra.mxu0 0.0
        %1547 = vmatprep.subr.mxu0 0.0
        %1548 = vmatpush2.msra.mxu0 0.0
        %1549 = vmatprep.subr.mxu0 0.0
        %1550 = vmatpush2.msra.mxu0 0.0
        %1551 = vmatprep.subr.mxu0 0.0
        %1552 = vmatpush2.msra.mxu0 0.0
        %1553 = vmatprep.subr.mxu0 0.0
        %1554 = vmatpush2.msra.mxu0 0.0
        %1555 = vmatprep.subr.mxu0 0.0
        %1556 = vmatpush2.msra.mxu0 0.0
        %1557 = vmatprep.subr.mxu0 0.0
        %1558 = vmatpush2.msra.mxu0 0.0
        %1559 = vmatprep.subr.mxu0 0.0
        %1560 = vmatpush2.msra.mxu0 0.0
        %1561 = vmatprep.subr.mxu0 0.0
        %1562 = vmatpush2.msra.mxu0 0.0
        %1563 = vmatprep.subr.mxu0 0.0
        %1564 = vmatpush2.msra.mxu0 0.0
        %1565 = vmatprep.subr.mxu0 0.0
        %1566 = vmatpush2.msra.mxu0 0.0
        %1567 = vmatprep.subr.mxu0 0.0
        %1568 = vmatpush2.msra.mxu0 0.0
        %1569 = vmatprep.subr.mxu0 0.0
        %1570 = vmatpush2.msra.mxu0 0.0
        %1571 = vmatprep.subr.mxu0 0.0
        %1572 = vmatpush2.msra.mxu0 0.0
        %1573 = vmatprep.mubr.f32.mxu0 0.0
        %1574 = vmatmul.mubr.f32.gmra.mxu0 %v1507
        %v1575 = vpop.f32.mrf.mxu0
        %v1576 = vadd.f32 0.0, %v1575
        %v1577 = vpop.f32.mrf.mxu0
        %1578 = vdwg.mxu0
        %1579 = vrot.lane.b32.xlu0 %v1047, 104
        %v1580 = vpop.permute.xlu0 %1579
        %v1582 = vsel %vm970, %v1580, 0.0
        %1583 = vadd.xlane.f32.xlu0 %v1582
        %v1584 = vpop.xlane.xlu0 %1583
        %v1585 = vsel %vm1051, %v1576, -inf
        %1586 = vmax.xlane.f32.xlu0 %v1585
        %v1587 = vpop.xlane.xlu0 %1586
        %v1588 = vmax.f32 %v1587, %v1584
        %v1589 = vsub.f32 %v1576, %v1588
        %v1590 = vmul.f32 %v1589, 1.442695
        %v1591 = vpow.pop %v1590
        %v1592 = vsub.f32 %v1584, %v1588
        %v1593 = vmul.f32 %v1592, 1.442695
        %v1594 = vpow.pop %v1593
        %v1595 = vsel %vm1051, %v1591, 0.0
        %1596 = vadd.xlane.f32.xlu0 %v1595
        %v1597 = vpop.xlane.xlu0 %1596
        %v1598 = vadd.f32 %v1594, %v1597
        %v1599 = vrcp.pop %v1598
        %s1600 = scalar_lea.vmem [#allocation3], 48
        %v1601 = vld [vmem:[%s1600] sm:$0xff]
        %v1602 = vld [vmem:[%s1600 + $0x8] sm:$0xff]
        %v1603 = vmul.f32 %v1594, %v967
        %1605 = vrot.lane.b32.xlu0 %v1603, 96
        %v1606 = vpop.permute.xlu0 %1605
        %v1609 = vsel %vm1051, %v1591, 0
        %1611 = vmatprep.subr.mxu0 0.0
        %1612 = vmatpush1.msra.mxu0 0.0
        %1613 = vmatprep.subr.mxu0 0.0
        %1614 = vmatpush1.msra.mxu0 0.0
        %1615 = vmatprep.subr.mxu0 0.0
        %1616 = vmatpush1.msra.mxu0 0.0
        %1617 = vmatprep.subr.mxu0 0.0
        %1618 = vmatpush1.msra.mxu0 0.0
        %1619 = vmatprep.subr.mxu0 0.0
        %1620 = vmatpush1.msra.mxu0 0.0
        %1621 = vmatprep.subr.mxu0 0.0
        %1622 = vmatpush1.msra.mxu0 0.0
        %1623 = vmatprep.subr.mxu0 0.0
        %1624 = vmatpush1.msra.mxu0 0.0
        %1625 = vmatprep.subr.mxu0 0.0
        %1626 = vmatpush1.msra.mxu0 0.0
        %1627 = vmatprep.subr.mxu0 0.0
        %1628 = vmatpush1.msra.mxu0 0.0
        %1629 = vmatprep.subr.mxu0 0.0
        %1630 = vmatpush1.msra.mxu0 0.0
        %1631 = vmatprep.subr.mxu0 0.0
        %1632 = vmatpush1.msra.mxu0 0.0
        %1633 = vmatprep.subr.mxu0 0.0
        %1634 = vmatpush1.msra.mxu0 0.0
        %1635 = vmatprep.subr.mxu0 0.0
        %1636 = vmatpush1.msra.mxu0 0.0
        %1637 = vmatprep.subr.mxu0 0.0
        %1638 = vmatpush1.msra.mxu0 0.0
        %1639 = vmatprep.subr.mxu0 0.0
        %1640 = vmatpush1.msra.mxu0 %v1602
        %1641 = vmatprep.subr.mxu0 0.0
        %1642 = vmatpush1.msra.mxu0 %v1601
        %1643 = vmatprep.subr.mxu0 0.0
        %1644 = vmatpush2.msra.mxu0 0.0
        %1645 = vmatprep.subr.mxu0 0.0
        %1646 = vmatpush2.msra.mxu0 0.0
        %1647 = vmatprep.subr.mxu0 0.0
        %1648 = vmatpush2.msra.mxu0 0.0
        %1649 = vmatprep.subr.mxu0 0.0
        %1650 = vmatpush2.msra.mxu0 0.0
        %1651 = vmatprep.subr.mxu0 0.0
        %1652 = vmatpush2.msra.mxu0 0.0
        %1653 = vmatprep.subr.mxu0 0.0
        %1654 = vmatpush2.msra.mxu0 0.0
        %1655 = vmatprep.subr.mxu0 0.0
        %1656 = vmatpush2.msra.mxu0 0.0
        %1657 = vmatprep.subr.mxu0 0.0
        %1658 = vmatpush2.msra.mxu0 0.0
        %1659 = vmatprep.subr.mxu0 0.0
        %1660 = vmatpush2.msra.mxu0 0.0
        %1661 = vmatprep.subr.mxu0 0.0
        %1662 = vmatpush2.msra.mxu0 0.0
        %1663 = vmatprep.subr.mxu0 0.0
        %1664 = vmatpush2.msra.mxu0 0.0
        %1665 = vmatprep.subr.mxu0 0.0
        %1666 = vmatpush2.msra.mxu0 0.0
        %1667 = vmatprep.subr.mxu0 0.0
        %1668 = vmatpush2.msra.mxu0 0.0
        %1669 = vmatprep.subr.mxu0 0.0
        %1670 = vmatpush2.msra.mxu0 0.0
        %1671 = vmatprep.subr.mxu0 0.0
        %1672 = vmatpush2.msra.mxu0 0.0
        %1673 = vmatprep.subr.mxu0 0.0
        %1674 = vmatpush2.msra.mxu0 0.0
        %1675 = vmatprep.mubr.f32.mxu0 0.0
        %1676 = vmatmul.mubr.f32.gmra.mxu0 %v1609
        %v1677 = vpop.f32.mrf.mxu0
        %v1678 = vadd.f32 %v1606, %v1677
        %v1679 = vpop.f32.mrf.mxu0
        %1680 = vdwg.mxu0
        %v1681 = vmul.f32 %v1678, %v1599
        %v1682 = vadd.f32 %v1503, %v1681
        %v1683 = vadd.f32 %v1682, %v885
        %v1684 = vld [vmem:[%s7] sm:$0x1]
        %v1685 = vld [vmem:[%s8] sm:$0x1]
        %v1686 = vsel %vm894, %v1683, 0.0
        %1687 = vadd.xlane.f32.xlu0 %v1686
        %v1688 = vpop.xlane.xlu0 %1687
        %v1689 = vrcp.pop 32.0
        %v1690 = vmul.f32 %v1688, %v1689
        %v1691 = vsub.f32 %v1683, %v1690
        %v1692 = vmul.f32 %v1691, %v1691
        %v1693 = vsel %vm894, %v1692, 0.0
        %1694 = vadd.xlane.f32.xlu0 %v1693
        %v1695 = vpop.xlane.xlu0 %1694
        %v1696 = vmul.f32 %v1695, %v1689
        %v1697 = vadd.f32 %v1696, 1e-06
        %v1698 = vrsqrt.pop %v1697
        %v1699 = vmul.f32 %v1691, %v1698
        %v1701 = vlaneseq
        %v1702 = vshrl.u32 %v1701, 7
        %v1703 = vsub.s32 0, %v1702
        %v1704 = vrot.slane %v1684, %v1703
        %v1706 = vmul.f32 %v1699, %v1704
        %v1708 = vlaneseq
        %v1709 = vshrl.u32 %v1708, 7
        %v1710 = vsub.s32 0, %v1709
        %v1711 = vrot.slane %v1685, %v1710
        %v1713 = vadd.f32 %v1706, %v1711
        %v1714 = vld [vmem:[#allocation12] sm:$0xff]
        %v1715 = vld [vmem:[#allocation12 + $0x8] sm:$0xff]
        %v1716 = vld [vmem:[#allocation12 + $0x10] sm:$0xff]
        %v1717 = vld [vmem:[#allocation12 + $0x18] sm:$0xff]
        %v1718 = vld [vmem:[%s10] sm:$0x1]
        %v1720 = vlaneseq
        %v1721 = vshrl.u32 %v1720, 7
        %v1722 = vsub.s32 0, %v1721
        %v1723 = vrot.slane %v1718, %v1722
        %v1726 = vsel %vm894, %v1713, 0
        %1728 = vmatprep.subr.mxu0 0.0
        %1729 = vmatpush1.msra.mxu0 0.0
        %1730 = vmatprep.subr.mxu0 0.0
        %1731 = vmatpush1.msra.mxu0 0.0
        %1732 = vmatprep.subr.mxu0 0.0
        %1733 = vmatpush1.msra.mxu0 0.0
        %1734 = vmatprep.subr.mxu0 0.0
        %1735 = vmatpush1.msra.mxu0 0.0
        %1736 = vmatprep.subr.mxu0 0.0
        %1737 = vmatpush1.msra.mxu0 0.0
        %1738 = vmatprep.subr.mxu0 0.0
        %1739 = vmatpush1.msra.mxu0 0.0
        %1740 = vmatprep.subr.mxu0 0.0
        %1741 = vmatpush1.msra.mxu0 0.0
        %1742 = vmatprep.subr.mxu0 0.0
        %1743 = vmatpush1.msra.mxu0 0.0
        %1744 = vmatprep.subr.mxu0 0.0
        %1745 = vmatpush1.msra.mxu0 0.0
        %1746 = vmatprep.subr.mxu0 0.0
        %1747 = vmatpush1.msra.mxu0 0.0
        %1748 = vmatprep.subr.mxu0 0.0
        %1749 = vmatpush1.msra.mxu0 0.0
        %1750 = vmatprep.subr.mxu0 0.0
        %1751 = vmatpush1.msra.mxu0 0.0
        %1752 = vmatprep.subr.mxu0 0.0
        %1753 = vmatpush1.msra.mxu0 %v1717
        %1754 = vmatprep.subr.mxu0 0.0
        %1755 = vmatpush1.msra.mxu0 %v1716
        %1756 = vmatprep.subr.mxu0 0.0
        %1757 = vmatpush1.msra.mxu0 %v1715
        %1758 = vmatprep.subr.mxu0 0.0
        %1759 = vmatpush1.msra.mxu0 %v1714
        %1760 = vmatprep.subr.mxu0 0.0
        %1761 = vmatpush2.msra.mxu0 0.0
        %1762 = vmatprep.subr.mxu0 0.0
        %1763 = vmatpush2.msra.mxu0 0.0
        %1764 = vmatprep.subr.mxu0 0.0
        %1765 = vmatpush2.msra.mxu0 0.0
        %1766 = vmatprep.subr.mxu0 0.0
        %1767 = vmatpush2.msra.mxu0 0.0
        %1768 = vmatprep.subr.mxu0 0.0
        %1769 = vmatpush2.msra.mxu0 0.0
        %1770 = vmatprep.subr.mxu0 0.0
        %1771 = vmatpush2.msra.mxu0 0.0
        %1772 = vmatprep.subr.mxu0 0.0
        %1773 = vmatpush2.msra.mxu0 0.0
        %1774 = vmatprep.subr.mxu0 0.0
        %1775 = vmatpush2.msra.mxu0 0.0
        %1776 = vmatprep.subr.mxu0 0.0
        %1777 = vmatpush2.msra.mxu0 0.0
        %1778 = vmatprep.subr.mxu0 0.0
        %1779 = vmatpush2.msra.mxu0 0.0
        %1780 = vmatprep.subr.mxu0 0.0
        %1781 = vmatpush2.msra.mxu0 0.0
        %1782 = vmatprep.subr.mxu0 0.0
        %1783 = vmatpush2.msra.mxu0 0.0
        %1784 = vmatprep.subr.mxu0 0.0
        %1785 = vmatpush2.msra.mxu0 0.0
        %1786 = vmatprep.subr.mxu0 0.0
        %1787 = vmatpush2.msra.mxu0 0.0
        %1788 = vmatprep.subr.mxu0 0.0
        %1789 = vmatpush2.msra.mxu0 0.0
        %1790 = vmatprep.subr.mxu0 0.0
        %1791 = vmatpush2.msra.mxu0 0.0
        %1792 = vmatprep.mubr.f32.mxu0 0.0
        %1793 = vmatmul.mubr.f32.gmra.mxu0 %v1726
        %v1794 = vpop.f32.mrf.mxu0
        %v1795 = vadd.f32 %v1723, %v1794
        %v1796 = vpop.f32.mrf.mxu0
        %1797 = vdwg.mxu0
        %v1798 = vmax.f32 %v1795, 0.0
        %v1799 = vld [vmem:[#allocation13] sm:$0xff]
        %v1800 = vld [vmem:[#allocation13 + $0x8] sm:$0xff]
        %v1801 = vld [vmem:[#allocation13 + $0x10] sm:$0xff]
        %v1802 = vld [vmem:[#allocation13 + $0x18] sm:$0xff]
        %v1803 = vld [vmem:[%s12] sm:$0x1]
        %v1805 = vlaneseq
        %v1806 = vshrl.u32 %v1805, 7
        %v1807 = vsub.s32 0, %v1806
        %v1808 = vrot.slane %v1803, %v1807
        %v1811 = vsel %vm894, %v1798, 0
        %1813 = vmatprep.subr.mxu0 0.0
        %1814 = vmatpush1.msra.mxu0 0.0
        %1815 = vmatprep.subr.mxu0 0.0
        %1816 = vmatpush1.msra.mxu0 0.0
        %1817 = vmatprep.subr.mxu0 0.0
        %1818 = vmatpush1.msra.mxu0 0.0
        %1819 = vmatprep.subr.mxu0 0.0
        %1820 = vmatpush1.msra.mxu0 0.0
        %1821 = vmatprep.subr.mxu0 0.0
        %1822 = vmatpush1.msra.mxu0 0.0
        %1823 = vmatprep.subr.mxu0 0.0
        %1824 = vmatpush1.msra.mxu0 0.0
        %1825 = vmatprep.subr.mxu0 0.0
        %1826 = vmatpush1.msra.mxu0 0.0
        %1827 = vmatprep.subr.mxu0 0.0
        %1828 = vmatpush1.msra.mxu0 0.0
        %1829 = vmatprep.subr.mxu0 0.0
        %1830 = vmatpush1.msra.mxu0 0.0
        %1831 = vmatprep.subr.mxu0 0.0
        %1832 = vmatpush1.msra.mxu0 0.0
        %1833 = vmatprep.subr.mxu0 0.0
        %1834 = vmatpush1.msra.mxu0 0.0
        %1835 = vmatprep.subr.mxu0 0.0
        %1836 = vmatpush1.msra.mxu0 0.0
        %1837 = vmatprep.subr.mxu0 0.0
        %1838 = vmatpush1.msra.mxu0 %v1802
        %1839 = vmatprep.subr.mxu0 0.0
        %1840 = vmatpush1.msra.mxu0 %v1801
        %1841 = vmatprep.subr.mxu0 0.0
        %1842 = vmatpush1.msra.mxu0 %v1800
        %1843 = vmatprep.subr.mxu0 0.0
        %1844 = vmatpush1.msra.mxu0 %v1799
        %1845 = vmatprep.subr.mxu0 0.0
        %1846 = vmatpush2.msra.mxu0 0.0
        %1847 = vmatprep.subr.mxu0 0.0
        %1848 = vmatpush2.msra.mxu0 0.0
        %1849 = vmatprep.subr.mxu0 0.0
        %1850 = vmatpush2.msra.mxu0 0.0
        %1851 = vmatprep.subr.mxu0 0.0
        %1852 = vmatpush2.msra.mxu0 0.0
        %1853 = vmatprep.subr.mxu0 0.0
        %1854 = vmatpush2.msra.mxu0 0.0
        %1855 = vmatprep.subr.mxu0 0.0
        %1856 = vmatpush2.msra.mxu0 0.0
        %1857 = vmatprep.subr.mxu0 0.0
        %1858 = vmatpush2.msra.mxu0 0.0
        %1859 = vmatprep.subr.mxu0 0.0
        %1860 = vmatpush2.msra.mxu0 0.0
        %1861 = vmatprep.subr.mxu0 0.0
        %1862 = vmatpush2.msra.mxu0 0.0
        %1863 = vmatprep.subr.mxu0 0.0
        %1864 = vmatpush2.msra.mxu0 0.0
        %1865 = vmatprep.subr.mxu0 0.0
        %1866 = vmatpush2.msra.mxu0 0.0
        %1867 = vmatprep.subr.mxu0 0.0
        %1868 = vmatpush2.msra.mxu0 0.0
        %1869 = vmatprep.subr.mxu0 0.0
        %1870 = vmatpush2.msra.mxu0 0.0
        %1871 = vmatprep.subr.mxu0 0.0
        %1872 = vmatpush2.msra.mxu0 0.0
        %1873 = vmatprep.subr.mxu0 0.0
        %1874 = vmatpush2.msra.mxu0 0.0
        %1875 = vmatprep.subr.mxu0 0.0
        %1876 = vmatpush2.msra.mxu0 0.0
        %1877 = vmatprep.mubr.f32.mxu0 0.0
        %1878 = vmatmul.mubr.f32.gmra.mxu0 %v1811
        %v1879 = vpop.f32.mrf.mxu0
        %v1880 = vadd.f32 %v1808, %v1879
        %v1881 = vpop.f32.mrf.mxu0
        %1882 = vdwg.mxu0
        %v1883 = vadd.f32 %v1880, %v1713
        %v1884 = vld [vmem:[%s13] sm:$0x1]
        %v1885 = vld [vmem:[%s14] sm:$0x1]
        %v1886 = vsel %vm894, %v1883, 0.0
        %1887 = vadd.xlane.f32.xlu0 %v1886
        %v1888 = vpop.xlane.xlu0 %1887
        %v1889 = vmul.f32 %v1888, %v1689
        %v1890 = vsub.f32 %v1883, %v1889
        %v1891 = vmul.f32 %v1890, %v1890
        %v1892 = vsel %vm894, %v1891, 0.0
        %1893 = vadd.xlane.f32.xlu0 %v1892
        %v1894 = vpop.xlane.xlu0 %1893
        %v1895 = vmul.f32 %v1894, %v1689
        %v1896 = vadd.f32 %v1895, 1e-06
        %v1897 = vrsqrt.pop %v1896
        %v1898 = vmul.f32 %v1890, %v1897
        %v1900 = vlaneseq
        %v1901 = vshrl.u32 %v1900, 7
        %v1902 = vsub.s32 0, %v1901
        %v1903 = vrot.slane %v1884, %v1902
        %v1905 = vmul.f32 %v1898, %v1903
        %v1907 = vlaneseq
        %v1908 = vshrl.u32 %v1907, 7
        %v1909 = vsub.s32 0, %v1908
        %v1910 = vrot.slane %v1885, %v1909
        %v1912 = vadd.f32 %v1905, %v1910
        %1913 = vst.msk [vmem:[%s614] sm:$0xff] %vm894, %v1912
        %s1914 = sand.u32 %s384, 1
        %s1915 = scalar_lea.sflag [#allocation6], %s1914
        %s1916 = sand.u32 %s384, 1
        %s1917 = smul.addr %s1916, 8
        %s1918 = scalar_lea.vmem [#allocation15], %s1917
        // Predicated region
        $region109: #{tpu_custom_call.1} parent=79 // pred_check
          %p1919 = pneg %p394
        $region110: #{tpu_custom_call.1} parent=79 // pred_check_branch
          %1921 = sbr.rel (%p1919) target = $region112
        $region111: #{tpu_custom_call.1} parent=79 // pred_region
          %s1923 = ssub.s32 128, 128
          %1924 = vsyncadd %s1915, %s1923
          %s1925 = sadd.s32 %s40, %s39
          %s1926 = smul.addr %s1925, 128
          %s1927 = scalar_lea.hbm %s15, %s1926
          %s1929 = sshll.u32 %s1918, 4
          %s1930 = int_to_ptr.vmem [resolvable:$true] %s1929
          %1932 = dma.vmem_to_hbm [thread:$0]  %s1930, 128, %s1927, %s1915
        $region112: #{tpu_custom_call.1} parent=79 // pred_fallthru
          _
      $region80: #{tpu_custom_call.1} parent=5 // pred_fallthru
        _
      %p1933 = scmp.le.s32.totalorder 2, %s30
      // Predicated region
      $region113: #{tpu_custom_call.1} parent=5 // pred_check
        %p1934 = pneg %p1933
      $region114: #{tpu_custom_call.1} parent=5 // pred_check_branch
        %1936 = sbr.rel (%p1934) target = $region116
      $region115: #{tpu_custom_call.1} parent=5 // pred_region
        %s1937 = ssub.s32 %s30, 2
        // Predicated region
        $region117: #{tpu_custom_call.1} parent=115 // pred_check
          %p1938 = pneg %p400
        $region118: #{tpu_custom_call.1} parent=115 // pred_check_branch
          %1940 = sbr.rel (%p1938) target = $region120
        $region119: #{tpu_custom_call.1} parent=115 // pred_region
          %s1941 = sand.u32 %s385, 1
          %s1942 = scalar_lea.sflag [#allocation6], %s1941
          %s1943 = sand.u32 %s385, 1
          %s1944 = smul.addr %s1943, 8
          %s1945 = scalar_lea.vmem [#allocation15], %s1944
          %1946 = dma.done %s1942, 128
        $region120: #{tpu_custom_call.1} parent=115 // pred_fallthru
          _
      $region116: #{tpu_custom_call.1} parent=5 // pred_fallthru
        _
    $region6: #{tpu_custom_call.1} parent=1 // loop_footer
      %s34 = sadd.s32 1, %s30
    $region7: #{tpu_custom_call.1} parent=1 // loop_footer_branch
      %29 = sbr.rel target = $region3
    $region8: #{tpu_custom_call.1} parent=1 // loop_exit
      _
    %1947 = vsyncpa [#allocation5], 1
    %s1948 = scalar_lea.sflag [#allocation5], 1
    %1949 = vsyncpa %s1948, 1
    %1950 = vsyncpa [#allocation8], 1
    %1951 = vsyncpa [#allocation11], 1
    %1952 = vsyncpa [#allocation14], 1
    %1953 = vsyncpa [#allocation6], 1
    %s1954 = scalar_lea.sflag [#allocation6], 1
    %1955 = vsyncpa %s1954, 1

</llo_original>
